<compile_context>
chip_gen: v5e
topology: v5e:2x2
jax: 0.10.0
libtpu: 0.0.40
codegen_flags: <defaults>
</compile_context>

<pallas_src>
import functools

import jax
import jax.numpy as jnp
from jax.experimental import pallas as pl
from jax.experimental.pallas import tpu as pltpu


# -----------------------------------------------------------------------------
# Fused Pallas kernel: all LSTM layers + output Linear in one invocation
# -----------------------------------------------------------------------------
def _fused_lstm_am_kernel(num_layers, hidden, *refs):
    """Positional refs layout:
      x_ref                      (T, B, I)       time-major input
      [wih_l, whh_l, b_l] * L    (I_l,4H),(H,4H),(1,4H)   per LSTM layer
      wout_ref, bout_ref         (H, O), (1, O)           output Linear
      out_ref                    (T, B, O)
      gin_ref                    (T, B, 4H)  VMEM scratch: precomputed x-projection
      act_ref                    (T, B, H)   VMEM scratch: inter-layer activations
      h_scr, c_scr               (B, H)      VMEM scratch: recurrent carries
    """
    H = hidden
    x_ref = refs[0]
    layer_refs = refs[1:1 + 3 * num_layers]
    (wout_ref, bout_ref, out_ref,
     gin_ref, act_ref, h_scr, c_scr) = refs[1 + 3 * num_layers:]

    T, B, _ = x_ref.shape

    for layer in range(num_layers):
        wih_ref = layer_refs[3 * layer + 0]
        whh_ref = layer_refs[3 * layer + 1]
        b_ref = layer_refs[3 * layer + 2]

        # --- prologue: input projection for ALL timesteps at once (MXU) ------
        # gin = X @ W_ih^T + (b_ih + b_hh), bias folded here (not per step).
        inp = x_ref[...] if layer == 0 else act_ref[...]
        I_l = inp.shape[-1]
        gin = (
            jnp.dot(inp.reshape(T * B, I_l), wih_ref[...],
                    preferred_element_type=jnp.float32)
            + b_ref[...]
        )
        gin_ref[...] = gin.reshape(T, B, 4 * H)

        # --- recurrence: only the (B,H)@(H,4H) dot + gates on the serial path
        h_scr[...] = jnp.zeros_like(h_scr)
        c_scr[...] = jnp.zeros_like(c_scr)
        whh = whh_ref[...]  # hoist loop-invariant weight load

        def step(t, carry, whh=whh):
            h = h_scr[...]
            c = c_scr[...]
            gates = gin_ref[t] + jnp.dot(
                h, whh, preferred_element_type=jnp.float32)  # (B, 4H)
            # PyTorch gate order: i, f, g, o
            i_g = jax.nn.sigmoid(gates[:, 0 * H:1 * H])
            f_g = jax.nn.sigmoid(gates[:, 1 * H:2 * H])
            g_g = jnp.tanh(gates[:, 2 * H:3 * H])
            o_g = jax.nn.sigmoid(gates[:, 3 * H:4 * H])
            c_n = f_g * c + i_g * g_g
            h_n = o_g * jnp.tanh(c_n)
            c_scr[...] = c_n
            h_scr[...] = h_n
            act_ref[t] = h_n
            return carry

        jax.lax.fori_loop(0, T, step, 0, unroll=True)

    # --- epilogue: output Linear over all timesteps, one matmul + one store --
    act = act_ref[...].reshape(T * B, H)
    logits = (
        jnp.dot(act, wout_ref[...], preferred_element_type=jnp.float32)
        + bout_ref[...]
    )
    out_ref[...] = logits.reshape(out_ref.shape).astype(out_ref.dtype)


# -----------------------------------------------------------------------------
# Wrapper
# -----------------------------------------------------------------------------
@functools.partial(jax.jit, static_argnames=("num_layers",))
def lstm_am_forward(x_btI, params, num_layers):
    """LSTMAM.forward: x (B, T, input_size) -> logits (B, T, output_size)."""
    x = jnp.transpose(x_btI, (1, 0, 2)).astype(jnp.float32)   # (T, B, I)
    T, B, I = x.shape
    H = params["lstm"][0]["w_hh"].shape[1]
    O = params["out_w"].shape[0]

    args = [x]
    in_specs = [pl.BlockSpec((T, B, I), lambda: (0, 0, 0))]
    for layer in range(num_layers):
        p = params["lstm"][layer]
        I_l = p["w_ih"].shape[1]
        wih_t = jnp.transpose(p["w_ih"]).astype(jnp.float32)   # (I_l, 4H)
        whh_t = jnp.transpose(p["w_hh"]).astype(jnp.float32)   # (H, 4H)
        bias = (p["b_ih"] + p["b_hh"]).reshape(1, 4 * H).astype(jnp.float32)
        args += [wih_t, whh_t, bias]
        in_specs += [
            pl.BlockSpec((I_l, 4 * H), lambda: (0, 0)),
            pl.BlockSpec((H, 4 * H), lambda: (0, 0)),
            pl.BlockSpec((1, 4 * H), lambda: (0, 0)),
        ]
    wout_t = jnp.transpose(params["out_w"]).astype(jnp.float32)  # (H, O)
    bout = params["out_b"].reshape(1, O).astype(jnp.float32)
    args += [wout_t, bout]
    in_specs += [
        pl.BlockSpec((H, O), lambda: (0, 0)),
        pl.BlockSpec((1, O), lambda: (0, 0)),
    ]

    out_tbo = pl.pallas_call(
        functools.partial(_fused_lstm_am_kernel, num_layers, H),
        out_shape=jax.ShapeDtypeStruct((T, B, O), jnp.float32),
        in_specs=in_specs,
        out_specs=pl.BlockSpec((T, B, O), lambda: (0, 0, 0)),
        scratch_shapes=[
            pltpu.VMEM((T, B, 4 * H), jnp.float32),  # precomputed input proj
            pltpu.VMEM((T, B, H), jnp.float32),      # inter-layer activations
            pltpu.VMEM((B, H), jnp.float32),         # h carry
            pltpu.VMEM((B, H), jnp.float32),         # c carry
        ],
        compiler_params=pltpu.CompilerParams(
            vmem_limit_bytes=32 * 1024 * 1024,
        ),
    )(*args)
    return jnp.transpose(out_tbo, (1, 0, 2))                   # (B, T, O)


# -----------------------------------------------------------------------------
# Pure-JAX reference (for correctness check)
# -----------------------------------------------------------------------------
def lstm_am_reference(x_btI, params, num_layers):
    x = jnp.transpose(x_btI, (1, 0, 2)).astype(jnp.float32)   # (T, B, I)
    for layer in range(num_layers):
        p = params["lstm"][layer]
        H = p["w_hh"].shape[1]
        B = x.shape[1]

        def step(carry, x_t, p=p, H=H):
            h, c = carry
            gates = (x_t @ p["w_ih"].T + p["b_ih"]
                     + h @ p["w_hh"].T + p["b_hh"])
            i = jax.nn.sigmoid(gates[:, 0 * H:1 * H])
            f = jax.nn.sigmoid(gates[:, 1 * H:2 * H])
            g = jnp.tanh(gates[:, 2 * H:3 * H])
            o = jax.nn.sigmoid(gates[:, 3 * H:4 * H])
            c = f * c + i * g
            h = o * jnp.tanh(c)
            return (h, c), h

        init = (jnp.zeros((B, H), jnp.float32), jnp.zeros((B, H), jnp.float32))
        _, x = jax.lax.scan(step, init, x)
    out = x @ params["out_w"].T + params["out_b"]
    return jnp.transpose(out, (1, 0, 2))


# -----------------------------------------------------------------------------
# Parameter init (PyTorch-style uniform, deterministic)
# -----------------------------------------------------------------------------
def init_params(key, input_size, hidden_size, output_size, num_layers):
    k = 1.0 / jnp.sqrt(hidden_size)
    params = {"lstm": []}
    for layer in range(num_layers):
        in_sz = input_size if layer == 0 else hidden_size
        key, k1, k2, k3, k4 = jax.random.split(key, 5)
        params["lstm"].append({
            "w_ih": jax.random.uniform(k1, (4 * hidden_size, in_sz),
                                       jnp.float32, -k, k),
            "w_hh": jax.random.uniform(k2, (4 * hidden_size, hidden_size),
                                       jnp.float32, -k, k),
            "b_ih": jax.random.uniform(k3, (4 * hidden_size,),
                                       jnp.float32, -k, k),
            "b_hh": jax.random.uniform(k4, (4 * hidden_size,),
                                       jnp.float32, -k, k),
        })
    kl = 1.0 / jnp.sqrt(hidden_size)
    key, k1, k2 = jax.random.split(key, 3)
    params["out_w"] = jax.random.uniform(k1, (output_size, hidden_size),
                                         jnp.float32, -kl, kl)
    params["out_b"] = jax.random.uniform(k2, (output_size,),
                                         jnp.float32, -kl, kl)
    return params


# -----------------------------------------------------------------------------
if __name__ == "__main__":
    # Small LSTMAM config: input_size=16, output_size=24, hidden_size=32,
    # num_layers=2, dropout=0.0, bidirectional=False
    B, T = 2, 8
    INPUT, HIDDEN, OUTPUT, NUM_LAYERS = 16, 32, 24, 2

    key = jax.random.PRNGKey(0)
    kx, kp = jax.random.split(key)
    x = jax.random.normal(kx, (B, T, INPUT), jnp.float32)   # batch-first input
    params = init_params(kp, INPUT, HIDDEN, OUTPUT, NUM_LAYERS)

    out = lstm_am_forward(x, params, NUM_LAYERS)
    out = jax.block_until_ready(out)
    assert out.shape == (B, T, OUTPUT), out.shape

    ref = jax.block_until_ready(lstm_am_reference(x, params, NUM_LAYERS))
    assert jnp.allclose(out, ref, atol=1e-5, rtol=1e-5), \
        float(jnp.max(jnp.abs(out - ref)))

    print("KERNEL_OK")
</pallas_src>

<mosaic_0001>
module attributes {stable_mosaic.version = 11 : i64} {
  func.func @_fused_lstm_am_kernel(%arg0: memref<8x2x16xf32, #tpu.memory_space<vmem>>, %arg1: memref<16x128xf32, #tpu.memory_space<vmem>>, %arg2: memref<32x128xf32, #tpu.memory_space<vmem>>, %arg3: memref<1x128xf32, #tpu.memory_space<vmem>>, %arg4: memref<32x128xf32, #tpu.memory_space<vmem>>, %arg5: memref<32x128xf32, #tpu.memory_space<vmem>>, %arg6: memref<1x128xf32, #tpu.memory_space<vmem>>, %arg7: memref<32x24xf32, #tpu.memory_space<vmem>>, %arg8: memref<1x24xf32, #tpu.memory_space<vmem>>, %arg9: memref<8x2x24xf32, #tpu.memory_space<vmem>>, %arg10: memref<8x2x128xf32, #tpu.memory_space<vmem>>, %arg11: memref<8x2x32xf32, #tpu.memory_space<vmem>>, %arg12: memref<2x32xf32, #tpu.memory_space<vmem>>, %arg13: memref<2x32xf32, #tpu.memory_space<vmem>>) attributes {dimension_semantics = [], scalar_prefetch = 0 : i64, scratch_operands = 4 : i64, tpu.core_type = #tpu.core_type<tc>} {
    %c0 = arith.constant 0 : index
    %c0_0 = arith.constant 0 : index
    %c0_1 = arith.constant 0 : index
    %0 = vector.load %arg0[%c0, %c0_0, %c0_1] : memref<8x2x16xf32, #tpu.memory_space<vmem>>, vector<8x2x16xf32>
    %1 = vector.shape_cast %0 : vector<8x2x16xf32> to vector<16x16xf32>
    %c0_2 = arith.constant 0 : index
    %c0_3 = arith.constant 0 : index
    %2 = vector.load %arg1[%c0_2, %c0_3] : memref<16x128xf32, #tpu.memory_space<vmem>>, vector<16x128xf32>
    %cst = arith.constant dense<0.000000e+00> : vector<16x128xf32>
    %3 = tpu.matmul %1, %2, %cst {dimension_numbers = #tpu.dot_dimension_numbers<[1], [0], [0], [1], [0, 0, 1, 1], [], []>} : vector<16x16xf32>, vector<16x128xf32>, vector<16x128xf32> -> vector<16x128xf32>
    %c0_4 = arith.constant 0 : index
    %c0_5 = arith.constant 0 : index
    %4 = vector.load %arg3[%c0_4, %c0_5] : memref<1x128xf32, #tpu.memory_space<vmem>>, vector<1x128xf32>
    %5 = vector.broadcast %4 : vector<1x128xf32> to vector<16x128xf32>
    %6 = arith.addf %3, %5 : vector<16x128xf32>
    %7 = vector.shape_cast %6 : vector<16x128xf32> to vector<8x2x128xf32>
    %c0_6 = arith.constant 0 : index
    %c0_7 = arith.constant 0 : index
    %c0_8 = arith.constant 0 : index
    %8 = vector.load %arg10[%c0_6, %c0_7, %c0_8] : memref<8x2x128xf32, #tpu.memory_space<vmem>>, vector<8x2x128xf32>
    tpu.vector_store %arg10[%c0_6, %c0_7, %c0_8], %7 {strides = array<i32>} : memref<8x2x128xf32, #tpu.memory_space<vmem>>, vector<8x2x128xf32>,
    %cst_9 = arith.constant 0.000000e+00 : f32
    %9 = vector.broadcast %cst_9 : f32 to vector<2x32xf32>
    %c0_10 = arith.constant 0 : index
    %c0_11 = arith.constant 0 : index
    %10 = vector.load %arg12[%c0_10, %c0_11] : memref<2x32xf32, #tpu.memory_space<vmem>>, vector<2x32xf32>
    tpu.vector_store %arg12[%c0_10, %c0_11], %9 {strides = array<i32>} : memref<2x32xf32, #tpu.memory_space<vmem>>, vector<2x32xf32>,
    %cst_12 = arith.constant 0.000000e+00 : f32
    %11 = vector.broadcast %cst_12 : f32 to vector<2x32xf32>
    %c0_13 = arith.constant 0 : index
    %c0_14 = arith.constant 0 : index
    %12 = vector.load %arg13[%c0_13, %c0_14] : memref<2x32xf32, #tpu.memory_space<vmem>>, vector<2x32xf32>
    tpu.vector_store %arg13[%c0_13, %c0_14], %11 {strides = array<i32>} : memref<2x32xf32, #tpu.memory_space<vmem>>, vector<2x32xf32>,
    %c0_15 = arith.constant 0 : index
    %c0_16 = arith.constant 0 : index
    %13 = vector.load %arg2[%c0_15, %c0_16] : memref<32x128xf32, #tpu.memory_space<vmem>>, vector<32x128xf32>
    %c0_i32 = arith.constant 0 : i32
    %c0_17 = arith.constant 0 : index
    %c0_18 = arith.constant 0 : index
    %14 = vector.load %arg12[%c0_17, %c0_18] : memref<2x32xf32, #tpu.memory_space<vmem>>, vector<2x32xf32>
    %c0_19 = arith.constant 0 : index
    %c0_20 = arith.constant 0 : index
    %15 = vector.load %arg13[%c0_19, %c0_20] : memref<2x32xf32, #tpu.memory_space<vmem>>, vector<2x32xf32>
    %16 = arith.index_cast %c0_i32 : i32 to index
    %c0_21 = arith.constant 0 : index
    %c0_22 = arith.constant 0 : index
    %17 = vector.load %arg10[%16, %c0_21, %c0_22] : memref<8x2x128xf32, #tpu.memory_space<vmem>>, vector<1x2x128xf32>
    %18 = vector.shape_cast %17 : vector<1x2x128xf32> to vector<2x128xf32>
    %cst_23 = arith.constant dense<0.000000e+00> : vector<2x128xf32>
    %19 = tpu.matmul %14, %13, %cst_23 {dimension_numbers = #tpu.dot_dimension_numbers<[1], [0], [0], [1], [0, 0, 1, 1], [], []>} : vector<2x32xf32>, vector<32x128xf32>, vector<2x128xf32> -> vector<2x128xf32>
    %20 = arith.addf %18, %19 : vector<2x128xf32>
    %21 = vector.extract_strided_slice %20 {offsets = [0, 0], sizes = [2, 32], strides = [1, 1]} : vector<2x128xf32> to vector<2x32xf32>
    %22 = arith.negf %21 : vector<2x32xf32>
    %23 = math.exp %22 : vector<2x32xf32>
    %cst_24 = arith.constant 1.000000e+00 : f32
    %24 = vector.broadcast %cst_24 : f32 to vector<2x32xf32>
    %25 = arith.addf %24, %23 : vector<2x32xf32>
    %26 = arith.divf %24, %25 : vector<2x32xf32>
    %27 = vector.extract_strided_slice %20 {offsets = [0, 32], sizes = [2, 32], strides = [1, 1]} : vector<2x128xf32> to vector<2x32xf32>
    %28 = arith.negf %27 : vector<2x32xf32>
    %29 = math.exp %28 : vector<2x32xf32>
    %cst_25 = arith.constant 1.000000e+00 : f32
    %30 = vector.broadcast %cst_25 : f32 to vector<2x32xf32>
    %31 = arith.addf %30, %29 : vector<2x32xf32>
    %32 = arith.divf %30, %31 : vector<2x32xf32>
    %33 = vector.extract_strided_slice %20 {offsets = [0, 64], sizes = [2, 32], strides = [1, 1]} : vector<2x128xf32> to vector<2x32xf32>
    %34 = math.tanh %33 : vector<2x32xf32>
    %35 = vector.extract_strided_slice %20 {offsets = [0, 96], sizes = [2, 32], strides = [1, 1]} : vector<2x128xf32> to vector<2x32xf32>
    %36 = arith.negf %35 : vector<2x32xf32>
    %37 = math.exp %36 : vector<2x32xf32>
    %cst_26 = arith.constant 1.000000e+00 : f32
    %38 = vector.broadcast %cst_26 : f32 to vector<2x32xf32>
    %39 = arith.addf %38, %37 : vector<2x32xf32>
    %40 = arith.divf %38, %39 : vector<2x32xf32>
    %41 = arith.mulf %32, %15 : vector<2x32xf32>
    %42 = arith.mulf %26, %34 : vector<2x32xf32>
    %43 = arith.addf %41, %42 : vector<2x32xf32>
    %44 = math.tanh %43 : vector<2x32xf32>
    %45 = arith.mulf %40, %44 : vector<2x32xf32>
    %c0_27 = arith.constant 0 : index
    %c0_28 = arith.constant 0 : index
    %46 = vector.load %arg13[%c0_27, %c0_28] : memref<2x32xf32, #tpu.memory_space<vmem>>, vector<2x32xf32>
    tpu.vector_store %arg13[%c0_27, %c0_28], %43 {strides = array<i32>} : memref<2x32xf32, #tpu.memory_space<vmem>>, vector<2x32xf32>,
    %c0_29 = arith.constant 0 : index
    %c0_30 = arith.constant 0 : index
    %47 = vector.load %arg12[%c0_29, %c0_30] : memref<2x32xf32, #tpu.memory_space<vmem>>, vector<2x32xf32>
    tpu.vector_store %arg12[%c0_29, %c0_30], %45 {strides = array<i32>} : memref<2x32xf32, #tpu.memory_space<vmem>>, vector<2x32xf32>,
    %48 = arith.index_cast %c0_i32 : i32 to index
    %c0_31 = arith.constant 0 : index
    %c0_32 = arith.constant 0 : index
    %49 = vector.load %arg11[%48, %c0_31, %c0_32] : memref<8x2x32xf32, #tpu.memory_space<vmem>>, vector<1x2x32xf32>
    %50 = vector.shape_cast %49 : vector<1x2x32xf32> to vector<2x32xf32>
    %51 = vector.shape_cast %45 : vector<2x32xf32> to vector<1x2x32xf32>
    tpu.vector_store %arg11[%48, %c0_31, %c0_32], %51 {strides = array<i32>} : memref<8x2x32xf32, #tpu.memory_space<vmem>>, vector<1x2x32xf32>,
    %c1_i32 = arith.constant 1 : i32
    %c0_33 = arith.constant 0 : index
    %c0_34 = arith.constant 0 : index
    %52 = vector.load %arg12[%c0_33, %c0_34] : memref<2x32xf32, #tpu.memory_space<vmem>>, vector<2x32xf32>
    %c0_35 = arith.constant 0 : index
    %c0_36 = arith.constant 0 : index
    %53 = vector.load %arg13[%c0_35, %c0_36] : memref<2x32xf32, #tpu.memory_space<vmem>>, vector<2x32xf32>
    %54 = arith.index_cast %c1_i32 : i32 to index
    %c0_37 = arith.constant 0 : index
    %c0_38 = arith.constant 0 : index
    %55 = vector.load %arg10[%54, %c0_37, %c0_38] : memref<8x2x128xf32, #tpu.memory_space<vmem>>, vector<1x2x128xf32>
    %56 = vector.shape_cast %55 : vector<1x2x128xf32> to vector<2x128xf32>
    %cst_39 = arith.constant dense<0.000000e+00> : vector<2x128xf32>
    %57 = tpu.matmul %52, %13, %cst_39 {dimension_numbers = #tpu.dot_dimension_numbers<[1], [0], [0], [1], [0, 0, 1, 1], [], []>} : vector<2x32xf32>, vector<32x128xf32>, vector<2x128xf32> -> vector<2x128xf32>
    %58 = arith.addf %56, %57 : vector<2x128xf32>
    %59 = vector.extract_strided_slice %58 {offsets = [0, 0], sizes = [2, 32], strides = [1, 1]} : vector<2x128xf32> to vector<2x32xf32>
    %60 = arith.negf %59 : vector<2x32xf32>
    %61 = math.exp %60 : vector<2x32xf32>
    %cst_40 = arith.constant 1.000000e+00 : f32
    %62 = vector.broadcast %cst_40 : f32 to vector<2x32xf32>
    %63 = arith.addf %62, %61 : vector<2x32xf32>
    %64 = arith.divf %62, %63 : vector<2x32xf32>
    %65 = vector.extract_strided_slice %58 {offsets = [0, 32], sizes = [2, 32], strides = [1, 1]} : vector<2x128xf32> to vector<2x32xf32>
    %66 = arith.negf %65 : vector<2x32xf32>
    %67 = math.exp %66 : vector<2x32xf32>
    %cst_41 = arith.constant 1.000000e+00 : f32
    %68 = vector.broadcast %cst_41 : f32 to vector<2x32xf32>
    %69 = arith.addf %68, %67 : vector<2x32xf32>
    %70 = arith.divf %68, %69 : vector<2x32xf32>
    %71 = vector.extract_strided_slice %58 {offsets = [0, 64], sizes = [2, 32], strides = [1, 1]} : vector<2x128xf32> to vector<2x32xf32>
    %72 = math.tanh %71 : vector<2x32xf32>
    %73 = vector.extract_strided_slice %58 {offsets = [0, 96], sizes = [2, 32], strides = [1, 1]} : vector<2x128xf32> to vector<2x32xf32>
    %74 = arith.negf %73 : vector<2x32xf32>
    %75 = math.exp %74 : vector<2x32xf32>
    %cst_42 = arith.constant 1.000000e+00 : f32
    %76 = vector.broadcast %cst_42 : f32 to vector<2x32xf32>
    %77 = arith.addf %76, %75 : vector<2x32xf32>
    %78 = arith.divf %76, %77 : vector<2x32xf32>
    %79 = arith.mulf %70, %53 : vector<2x32xf32>
    %80 = arith.mulf %64, %72 : vector<2x32xf32>
    %81 = arith.addf %79, %80 : vector<2x32xf32>
    %82 = math.tanh %81 : vector<2x32xf32>
    %83 = arith.mulf %78, %82 : vector<2x32xf32>
    %c0_43 = arith.constant 0 : index
    %c0_44 = arith.constant 0 : index
    %84 = vector.load %arg13[%c0_43, %c0_44] : memref<2x32xf32, #tpu.memory_space<vmem>>, vector<2x32xf32>
    tpu.vector_store %arg13[%c0_43, %c0_44], %81 {strides = array<i32>} : memref<2x32xf32, #tpu.memory_space<vmem>>, vector<2x32xf32>,
    %c0_45 = arith.constant 0 : index
    %c0_46 = arith.constant 0 : index
    %85 = vector.load %arg12[%c0_45, %c0_46] : memref<2x32xf32, #tpu.memory_space<vmem>>, vector<2x32xf32>
    tpu.vector_store %arg12[%c0_45, %c0_46], %83 {strides = array<i32>} : memref<2x32xf32, #tpu.memory_space<vmem>>, vector<2x32xf32>,
    %86 = arith.index_cast %c1_i32 : i32 to index
    %c0_47 = arith.constant 0 : index
    %c0_48 = arith.constant 0 : index
    %87 = vector.load %arg11[%86, %c0_47, %c0_48] : memref<8x2x32xf32, #tpu.memory_space<vmem>>, vector<1x2x32xf32>
    %88 = vector.shape_cast %87 : vector<1x2x32xf32> to vector<2x32xf32>
    %89 = vector.shape_cast %83 : vector<2x32xf32> to vector<1x2x32xf32>
    tpu.vector_store %arg11[%86, %c0_47, %c0_48], %89 {strides = array<i32>} : memref<8x2x32xf32, #tpu.memory_space<vmem>>, vector<1x2x32xf32>,
    %c2_i32 = arith.constant 2 : i32
    %c0_49 = arith.constant 0 : index
    %c0_50 = arith.constant 0 : index
    %90 = vector.load %arg12[%c0_49, %c0_50] : memref<2x32xf32, #tpu.memory_space<vmem>>, vector<2x32xf32>
    %c0_51 = arith.constant 0 : index
    %c0_52 = arith.constant 0 : index
    %91 = vector.load %arg13[%c0_51, %c0_52] : memref<2x32xf32, #tpu.memory_space<vmem>>, vector<2x32xf32>
    %92 = arith.index_cast %c2_i32 : i32 to index
    %c0_53 = arith.constant 0 : index
    %c0_54 = arith.constant 0 : index
    %93 = vector.load %arg10[%92, %c0_53, %c0_54] : memref<8x2x128xf32, #tpu.memory_space<vmem>>, vector<1x2x128xf32>
    %94 = vector.shape_cast %93 : vector<1x2x128xf32> to vector<2x128xf32>
    %cst_55 = arith.constant dense<0.000000e+00> : vector<2x128xf32>
    %95 = tpu.matmul %90, %13, %cst_55 {dimension_numbers = #tpu.dot_dimension_numbers<[1], [0], [0], [1], [0, 0, 1, 1], [], []>} : vector<2x32xf32>, vector<32x128xf32>, vector<2x128xf32> -> vector<2x128xf32>
    %96 = arith.addf %94, %95 : vector<2x128xf32>
    %97 = vector.extract_strided_slice %96 {offsets = [0, 0], sizes = [2, 32], strides = [1, 1]} : vector<2x128xf32> to vector<2x32xf32>
    %98 = arith.negf %97 : vector<2x32xf32>
    %99 = math.exp %98 : vector<2x32xf32>
    %cst_56 = arith.constant 1.000000e+00 : f32
    %100 = vector.broadcast %cst_56 : f32 to vector<2x32xf32>
    %101 = arith.addf %100, %99 : vector<2x32xf32>
    %102 = arith.divf %100, %101 : vector<2x32xf32>
    %103 = vector.extract_strided_slice %96 {offsets = [0, 32], sizes = [2, 32], strides = [1, 1]} : vector<2x128xf32> to vector<2x32xf32>
    %104 = arith.negf %103 : vector<2x32xf32>
    %105 = math.exp %104 : vector<2x32xf32>
    %cst_57 = arith.constant 1.000000e+00 : f32
    %106 = vector.broadcast %cst_57 : f32 to vector<2x32xf32>
    %107 = arith.addf %106, %105 : vector<2x32xf32>
    %108 = arith.divf %106, %107 : vector<2x32xf32>
    %109 = vector.extract_strided_slice %96 {offsets = [0, 64], sizes = [2, 32], strides = [1, 1]} : vector<2x128xf32> to vector<2x32xf32>
    %110 = math.tanh %109 : vector<2x32xf32>
    %111 = vector.extract_strided_slice %96 {offsets = [0, 96], sizes = [2, 32], strides = [1, 1]} : vector<2x128xf32> to vector<2x32xf32>
    %112 = arith.negf %111 : vector<2x32xf32>
    %113 = math.exp %112 : vector<2x32xf32>
    %cst_58 = arith.constant 1.000000e+00 : f32
    %114 = vector.broadcast %cst_58 : f32 to vector<2x32xf32>
    %115 = arith.addf %114, %113 : vector<2x32xf32>
    %116 = arith.divf %114, %115 : vector<2x32xf32>
    %117 = arith.mulf %108, %91 : vector<2x32xf32>
    %118 = arith.mulf %102, %110 : vector<2x32xf32>
    %119 = arith.addf %117, %118 : vector<2x32xf32>
    %120 = math.tanh %119 : vector<2x32xf32>
    %121 = arith.mulf %116, %120 : vector<2x32xf32>
    %c0_59 = arith.constant 0 : index
    %c0_60 = arith.constant 0 : index
    %122 = vector.load %arg13[%c0_59, %c0_60] : memref<2x32xf32, #tpu.memory_space<vmem>>, vector<2x32xf32>
    tpu.vector_store %arg13[%c0_59, %c0_60], %119 {strides = array<i32>} : memref<2x32xf32, #tpu.memory_space<vmem>>, vector<2x32xf32>,
    %c0_61 = arith.constant 0 : index
    %c0_62 = arith.constant 0 : index
    %123 = vector.load %arg12[%c0_61, %c0_62] : memref<2x32xf32, #tpu.memory_space<vmem>>, vector<2x32xf32>
    tpu.vector_store %arg12[%c0_61, %c0_62], %121 {strides = array<i32>} : memref<2x32xf32, #tpu.memory_space<vmem>>, vector<2x32xf32>,
    %124 = arith.index_cast %c2_i32 : i32 to index
    %c0_63 = arith.constant 0 : index
    %c0_64 = arith.constant 0 : index
    %125 = vector.load %arg11[%124, %c0_63, %c0_64] : memref<8x2x32xf32, #tpu.memory_space<vmem>>, vector<1x2x32xf32>
    %126 = vector.shape_cast %125 : vector<1x2x32xf32> to vector<2x32xf32>
    %127 = vector.shape_cast %121 : vector<2x32xf32> to vector<1x2x32xf32>
    tpu.vector_store %arg11[%124, %c0_63, %c0_64], %127 {strides = array<i32>} : memref<8x2x32xf32, #tpu.memory_space<vmem>>, vector<1x2x32xf32>,
    %c3_i32 = arith.constant 3 : i32
    %c0_65 = arith.constant 0 : index
    %c0_66 = arith.constant 0 : index
    %128 = vector.load %arg12[%c0_65, %c0_66] : memref<2x32xf32, #tpu.memory_space<vmem>>, vector<2x32xf32>
    %c0_67 = arith.constant 0 : index
    %c0_68 = arith.constant 0 : index
    %129 = vector.load %arg13[%c0_67, %c0_68] : memref<2x32xf32, #tpu.memory_space<vmem>>, vector<2x32xf32>
    %130 = arith.index_cast %c3_i32 : i32 to index
    %c0_69 = arith.constant 0 : index
    %c0_70 = arith.constant 0 : index
    %131 = vector.load %arg10[%130, %c0_69, %c0_70] : memref<8x2x128xf32, #tpu.memory_space<vmem>>, vector<1x2x128xf32>
    %132 = vector.shape_cast %131 : vector<1x2x128xf32> to vector<2x128xf32>
    %cst_71 = arith.constant dense<0.000000e+00> : vector<2x128xf32>
    %133 = tpu.matmul %128, %13, %cst_71 {dimension_numbers = #tpu.dot_dimension_numbers<[1], [0], [0], [1], [0, 0, 1, 1], [], []>} : vector<2x32xf32>, vector<32x128xf32>, vector<2x128xf32> -> vector<2x128xf32>
    %134 = arith.addf %132, %133 : vector<2x128xf32>
    %135 = vector.extract_strided_slice %134 {offsets = [0, 0], sizes = [2, 32], strides = [1, 1]} : vector<2x128xf32> to vector<2x32xf32>
    %136 = arith.negf %135 : vector<2x32xf32>
    %137 = math.exp %136 : vector<2x32xf32>
    %cst_72 = arith.constant 1.000000e+00 : f32
    %138 = vector.broadcast %cst_72 : f32 to vector<2x32xf32>
    %139 = arith.addf %138, %137 : vector<2x32xf32>
    %140 = arith.divf %138, %139 : vector<2x32xf32>
    %141 = vector.extract_strided_slice %134 {offsets = [0, 32], sizes = [2, 32], strides = [1, 1]} : vector<2x128xf32> to vector<2x32xf32>
    %142 = arith.negf %141 : vector<2x32xf32>
    %143 = math.exp %142 : vector<2x32xf32>
    %cst_73 = arith.constant 1.000000e+00 : f32
    %144 = vector.broadcast %cst_73 : f32 to vector<2x32xf32>
    %145 = arith.addf %144, %143 : vector<2x32xf32>
    %146 = arith.divf %144, %145 : vector<2x32xf32>
    %147 = vector.extract_strided_slice %134 {offsets = [0, 64], sizes = [2, 32], strides = [1, 1]} : vector<2x128xf32> to vector<2x32xf32>
    %148 = math.tanh %147 : vector<2x32xf32>
    %149 = vector.extract_strided_slice %134 {offsets = [0, 96], sizes = [2, 32], strides = [1, 1]} : vector<2x128xf32> to vector<2x32xf32>
    %150 = arith.negf %149 : vector<2x32xf32>
    %151 = math.exp %150 : vector<2x32xf32>
    %cst_74 = arith.constant 1.000000e+00 : f32
    %152 = vector.broadcast %cst_74 : f32 to vector<2x32xf32>
    %153 = arith.addf %152, %151 : vector<2x32xf32>
    %154 = arith.divf %152, %153 : vector<2x32xf32>
    %155 = arith.mulf %146, %129 : vector<2x32xf32>
    %156 = arith.mulf %140, %148 : vector<2x32xf32>
    %157 = arith.addf %155, %156 : vector<2x32xf32>
    %158 = math.tanh %157 : vector<2x32xf32>
    %159 = arith.mulf %154, %158 : vector<2x32xf32>
    %c0_75 = arith.constant 0 : index
    %c0_76 = arith.constant 0 : index
    %160 = vector.load %arg13[%c0_75, %c0_76] : memref<2x32xf32, #tpu.memory_space<vmem>>, vector<2x32xf32>
    tpu.vector_store %arg13[%c0_75, %c0_76], %157 {strides = array<i32>} : memref<2x32xf32, #tpu.memory_space<vmem>>, vector<2x32xf32>,
    %c0_77 = arith.constant 0 : index
    %c0_78 = arith.constant 0 : index
    %161 = vector.load %arg12[%c0_77, %c0_78] : memref<2x32xf32, #tpu.memory_space<vmem>>, vector<2x32xf32>
    tpu.vector_store %arg12[%c0_77, %c0_78], %159 {strides = array<i32>} : memref<2x32xf32, #tpu.memory_space<vmem>>, vector<2x32xf32>,
    %162 = arith.index_cast %c3_i32 : i32 to index
    %c0_79 = arith.constant 0 : index
    %c0_80 = arith.constant 0 : index
    %163 = vector.load %arg11[%162, %c0_79, %c0_80] : memref<8x2x32xf32, #tpu.memory_space<vmem>>, vector<1x2x32xf32>
    %164 = vector.shape_cast %163 : vector<1x2x32xf32> to vector<2x32xf32>
    %165 = vector.shape_cast %159 : vector<2x32xf32> to vector<1x2x32xf32>
    tpu.vector_store %arg11[%162, %c0_79, %c0_80], %165 {strides = array<i32>} : memref<8x2x32xf32, #tpu.memory_space<vmem>>, vector<1x2x32xf32>,
    %c4_i32 = arith.constant 4 : i32
    %c0_81 = arith.constant 0 : index
    %c0_82 = arith.constant 0 : index
    %166 = vector.load %arg12[%c0_81, %c0_82] : memref<2x32xf32, #tpu.memory_space<vmem>>, vector<2x32xf32>
    %c0_83 = arith.constant 0 : index
    %c0_84 = arith.constant 0 : index
    %167 = vector.load %arg13[%c0_83, %c0_84] : memref<2x32xf32, #tpu.memory_space<vmem>>, vector<2x32xf32>
    %168 = arith.index_cast %c4_i32 : i32 to index
    %c0_85 = arith.constant 0 : index
    %c0_86 = arith.constant 0 : index
    %169 = vector.load %arg10[%168, %c0_85, %c0_86] : memref<8x2x128xf32, #tpu.memory_space<vmem>>, vector<1x2x128xf32>
    %170 = vector.shape_cast %169 : vector<1x2x128xf32> to vector<2x128xf32>
    %cst_87 = arith.constant dense<0.000000e+00> : vector<2x128xf32>
    %171 = tpu.matmul %166, %13, %cst_87 {dimension_numbers = #tpu.dot_dimension_numbers<[1], [0], [0], [1], [0, 0, 1, 1], [], []>} : vector<2x32xf32>, vector<32x128xf32>, vector<2x128xf32> -> vector<2x128xf32>
    %172 = arith.addf %170, %171 : vector<2x128xf32>
    %173 = vector.extract_strided_slice %172 {offsets = [0, 0], sizes = [2, 32], strides = [1, 1]} : vector<2x128xf32> to vector<2x32xf32>
    %174 = arith.negf %173 : vector<2x32xf32>
    %175 = math.exp %174 : vector<2x32xf32>
    %cst_88 = arith.constant 1.000000e+00 : f32
    %176 = vector.broadcast %cst_88 : f32 to vector<2x32xf32>
    %177 = arith.addf %176, %175 : vector<2x32xf32>
    %178 = arith.divf %176, %177 : vector<2x32xf32>
    %179 = vector.extract_strided_slice %172 {offsets = [0, 32], sizes = [2, 32], strides = [1, 1]} : vector<2x128xf32> to vector<2x32xf32>
    %180 = arith.negf %179 : vector<2x32xf32>
    %181 = math.exp %180 : vector<2x32xf32>
    %cst_89 = arith.constant 1.000000e+00 : f32
    %182 = vector.broadcast %cst_89 : f32 to vector<2x32xf32>
    %183 = arith.addf %182, %181 : vector<2x32xf32>
    %184 = arith.divf %182, %183 : vector<2x32xf32>
    %185 = vector.extract_strided_slice %172 {offsets = [0, 64], sizes = [2, 32], strides = [1, 1]} : vector<2x128xf32> to vector<2x32xf32>
    %186 = math.tanh %185 : vector<2x32xf32>
    %187 = vector.extract_strided_slice %172 {offsets = [0, 96], sizes = [2, 32], strides = [1, 1]} : vector<2x128xf32> to vector<2x32xf32>
    %188 = arith.negf %187 : vector<2x32xf32>
    %189 = math.exp %188 : vector<2x32xf32>
    %cst_90 = arith.constant 1.000000e+00 : f32
    %190 = vector.broadcast %cst_90 : f32 to vector<2x32xf32>
    %191 = arith.addf %190, %189 : vector<2x32xf32>
    %192 = arith.divf %190, %191 : vector<2x32xf32>
    %193 = arith.mulf %184, %167 : vector<2x32xf32>
    %194 = arith.mulf %178, %186 : vector<2x32xf32>
    %195 = arith.addf %193, %194 : vector<2x32xf32>
    %196 = math.tanh %195 : vector<2x32xf32>
    %197 = arith.mulf %192, %196 : vector<2x32xf32>
    %c0_91 = arith.constant 0 : index
    %c0_92 = arith.constant 0 : index
    %198 = vector.load %arg13[%c0_91, %c0_92] : memref<2x32xf32, #tpu.memory_space<vmem>>, vector<2x32xf32>
    tpu.vector_store %arg13[%c0_91, %c0_92], %195 {strides = array<i32>} : memref<2x32xf32, #tpu.memory_space<vmem>>, vector<2x32xf32>,
    %c0_93 = arith.constant 0 : index
    %c0_94 = arith.constant 0 : index
    %199 = vector.load %arg12[%c0_93, %c0_94] : memref<2x32xf32, #tpu.memory_space<vmem>>, vector<2x32xf32>
    tpu.vector_store %arg12[%c0_93, %c0_94], %197 {strides = array<i32>} : memref<2x32xf32, #tpu.memory_space<vmem>>, vector<2x32xf32>,
    %200 = arith.index_cast %c4_i32 : i32 to index
    %c0_95 = arith.constant 0 : index
    %c0_96 = arith.constant 0 : index
    %201 = vector.load %arg11[%200, %c0_95, %c0_96] : memref<8x2x32xf32, #tpu.memory_space<vmem>>, vector<1x2x32xf32>
    %202 = vector.shape_cast %201 : vector<1x2x32xf32> to vector<2x32xf32>
    %203 = vector.shape_cast %197 : vector<2x32xf32> to vector<1x2x32xf32>
    tpu.vector_store %arg11[%200, %c0_95, %c0_96], %203 {strides = array<i32>} : memref<8x2x32xf32, #tpu.memory_space<vmem>>, vector<1x2x32xf32>,
    %c5_i32 = arith.constant 5 : i32
    %c0_97 = arith.constant 0 : index
    %c0_98 = arith.constant 0 : index
    %204 = vector.load %arg12[%c0_97, %c0_98] : memref<2x32xf32, #tpu.memory_space<vmem>>, vector<2x32xf32>
    %c0_99 = arith.constant 0 : index
    %c0_100 = arith.constant 0 : index
    %205 = vector.load %arg13[%c0_99, %c0_100] : memref<2x32xf32, #tpu.memory_space<vmem>>, vector<2x32xf32>
    %206 = arith.index_cast %c5_i32 : i32 to index
    %c0_101 = arith.constant 0 : index
    %c0_102 = arith.constant 0 : index
    %207 = vector.load %arg10[%206, %c0_101, %c0_102] : memref<8x2x128xf32, #tpu.memory_space<vmem>>, vector<1x2x128xf32>
    %208 = vector.shape_cast %207 : vector<1x2x128xf32> to vector<2x128xf32>
    %cst_103 = arith.constant dense<0.000000e+00> : vector<2x128xf32>
    %209 = tpu.matmul %204, %13, %cst_103 {dimension_numbers = #tpu.dot_dimension_numbers<[1], [0], [0], [1], [0, 0, 1, 1], [], []>} : vector<2x32xf32>, vector<32x128xf32>, vector<2x128xf32> -> vector<2x128xf32>
    %210 = arith.addf %208, %209 : vector<2x128xf32>
    %211 = vector.extract_strided_slice %210 {offsets = [0, 0], sizes = [2, 32], strides = [1, 1]} : vector<2x128xf32> to vector<2x32xf32>
    %212 = arith.negf %211 : vector<2x32xf32>
    %213 = math.exp %212 : vector<2x32xf32>
    %cst_104 = arith.constant 1.000000e+00 : f32
    %214 = vector.broadcast %cst_104 : f32 to vector<2x32xf32>
    %215 = arith.addf %214, %213 : vector<2x32xf32>
    %216 = arith.divf %214, %215 : vector<2x32xf32>
    %217 = vector.extract_strided_slice %210 {offsets = [0, 32], sizes = [2, 32], strides = [1, 1]} : vector<2x128xf32> to vector<2x32xf32>
    %218 = arith.negf %217 : vector<2x32xf32>
    %219 = math.exp %218 : vector<2x32xf32>
    %cst_105 = arith.constant 1.000000e+00 : f32
    %220 = vector.broadcast %cst_105 : f32 to vector<2x32xf32>
    %221 = arith.addf %220, %219 : vector<2x32xf32>
    %222 = arith.divf %220, %221 : vector<2x32xf32>
    %223 = vector.extract_strided_slice %210 {offsets = [0, 64], sizes = [2, 32], strides = [1, 1]} : vector<2x128xf32> to vector<2x32xf32>
    %224 = math.tanh %223 : vector<2x32xf32>
    %225 = vector.extract_strided_slice %210 {offsets = [0, 96], sizes = [2, 32], strides = [1, 1]} : vector<2x128xf32> to vector<2x32xf32>
    %226 = arith.negf %225 : vector<2x32xf32>
    %227 = math.exp %226 : vector<2x32xf32>
    %cst_106 = arith.constant 1.000000e+00 : f32
    %228 = vector.broadcast %cst_106 : f32 to vector<2x32xf32>
    %229 = arith.addf %228, %227 : vector<2x32xf32>
    %230 = arith.divf %228, %229 : vector<2x32xf32>
    %231 = arith.mulf %222, %205 : vector<2x32xf32>
    %232 = arith.mulf %216, %224 : vector<2x32xf32>
    %233 = arith.addf %231, %232 : vector<2x32xf32>
    %234 = math.tanh %233 : vector<2x32xf32>
    %235 = arith.mulf %230, %234 : vector<2x32xf32>
    %c0_107 = arith.constant 0 : index
    %c0_108 = arith.constant 0 : index
    %236 = vector.load %arg13[%c0_107, %c0_108] : memref<2x32xf32, #tpu.memory_space<vmem>>, vector<2x32xf32>
    tpu.vector_store %arg13[%c0_107, %c0_108], %233 {strides = array<i32>} : memref<2x32xf32, #tpu.memory_space<vmem>>, vector<2x32xf32>,
    %c0_109 = arith.constant 0 : index
    %c0_110 = arith.constant 0 : index
    %237 = vector.load %arg12[%c0_109, %c0_110] : memref<2x32xf32, #tpu.memory_space<vmem>>, vector<2x32xf32>
    tpu.vector_store %arg12[%c0_109, %c0_110], %235 {strides = array<i32>} : memref<2x32xf32, #tpu.memory_space<vmem>>, vector<2x32xf32>,
    %238 = arith.index_cast %c5_i32 : i32 to index
    %c0_111 = arith.constant 0 : index
    %c0_112 = arith.constant 0 : index
    %239 = vector.load %arg11[%238, %c0_111, %c0_112] : memref<8x2x32xf32, #tpu.memory_space<vmem>>, vector<1x2x32xf32>
    %240 = vector.shape_cast %239 : vector<1x2x32xf32> to vector<2x32xf32>
    %241 = vector.shape_cast %235 : vector<2x32xf32> to vector<1x2x32xf32>
    tpu.vector_store %arg11[%238, %c0_111, %c0_112], %241 {strides = array<i32>} : memref<8x2x32xf32, #tpu.memory_space<vmem>>, vector<1x2x32xf32>,
    %c6_i32 = arith.constant 6 : i32
    %c0_113 = arith.constant 0 : index
    %c0_114 = arith.constant 0 : index
    %242 = vector.load %arg12[%c0_113, %c0_114] : memref<2x32xf32, #tpu.memory_space<vmem>>, vector<2x32xf32>
    %c0_115 = arith.constant 0 : index
    %c0_116 = arith.constant 0 : index
    %243 = vector.load %arg13[%c0_115, %c0_116] : memref<2x32xf32, #tpu.memory_space<vmem>>, vector<2x32xf32>
    %244 = arith.index_cast %c6_i32 : i32 to index
    %c0_117 = arith.constant 0 : index
    %c0_118 = arith.constant 0 : index
    %245 = vector.load %arg10[%244, %c0_117, %c0_118] : memref<8x2x128xf32, #tpu.memory_space<vmem>>, vector<1x2x128xf32>
    %246 = vector.shape_cast %245 : vector<1x2x128xf32> to vector<2x128xf32>
    %cst_119 = arith.constant dense<0.000000e+00> : vector<2x128xf32>
    %247 = tpu.matmul %242, %13, %cst_119 {dimension_numbers = #tpu.dot_dimension_numbers<[1], [0], [0], [1], [0, 0, 1, 1], [], []>} : vector<2x32xf32>, vector<32x128xf32>, vector<2x128xf32> -> vector<2x128xf32>
    %248 = arith.addf %246, %247 : vector<2x128xf32>
    %249 = vector.extract_strided_slice %248 {offsets = [0, 0], sizes = [2, 32], strides = [1, 1]} : vector<2x128xf32> to vector<2x32xf32>
    %250 = arith.negf %249 : vector<2x32xf32>
    %251 = math.exp %250 : vector<2x32xf32>
    %cst_120 = arith.constant 1.000000e+00 : f32
    %252 = vector.broadcast %cst_120 : f32 to vector<2x32xf32>
    %253 = arith.addf %252, %251 : vector<2x32xf32>
    %254 = arith.divf %252, %253 : vector<2x32xf32>
    %255 = vector.extract_strided_slice %248 {offsets = [0, 32], sizes = [2, 32], strides = [1, 1]} : vector<2x128xf32> to vector<2x32xf32>
    %256 = arith.negf %255 : vector<2x32xf32>
    %257 = math.exp %256 : vector<2x32xf32>
    %cst_121 = arith.constant 1.000000e+00 : f32
    %258 = vector.broadcast %cst_121 : f32 to vector<2x32xf32>
    %259 = arith.addf %258, %257 : vector<2x32xf32>
    %260 = arith.divf %258, %259 : vector<2x32xf32>
    %261 = vector.extract_strided_slice %248 {offsets = [0, 64], sizes = [2, 32], strides = [1, 1]} : vector<2x128xf32> to vector<2x32xf32>
    %262 = math.tanh %261 : vector<2x32xf32>
    %263 = vector.extract_strided_slice %248 {offsets = [0, 96], sizes = [2, 32], strides = [1, 1]} : vector<2x128xf32> to vector<2x32xf32>
    %264 = arith.negf %263 : vector<2x32xf32>
    %265 = math.exp %264 : vector<2x32xf32>
    %cst_122 = arith.constant 1.000000e+00 : f32
    %266 = vector.broadcast %cst_122 : f32 to vector<2x32xf32>
    %267 = arith.addf %266, %265 : vector<2x32xf32>
    %268 = arith.divf %266, %267 : vector<2x32xf32>
    %269 = arith.mulf %260, %243 : vector<2x32xf32>
    %270 = arith.mulf %254, %262 : vector<2x32xf32>
    %271 = arith.addf %269, %270 : vector<2x32xf32>
    %272 = math.tanh %271 : vector<2x32xf32>
    %273 = arith.mulf %268, %272 : vector<2x32xf32>
    %c0_123 = arith.constant 0 : index
    %c0_124 = arith.constant 0 : index
    %274 = vector.load %arg13[%c0_123, %c0_124] : memref<2x32xf32, #tpu.memory_space<vmem>>, vector<2x32xf32>
    tpu.vector_store %arg13[%c0_123, %c0_124], %271 {strides = array<i32>} : memref<2x32xf32, #tpu.memory_space<vmem>>, vector<2x32xf32>,
    %c0_125 = arith.constant 0 : index
    %c0_126 = arith.constant 0 : index
    %275 = vector.load %arg12[%c0_125, %c0_126] : memref<2x32xf32, #tpu.memory_space<vmem>>, vector<2x32xf32>
    tpu.vector_store %arg12[%c0_125, %c0_126], %273 {strides = array<i32>} : memref<2x32xf32, #tpu.memory_space<vmem>>, vector<2x32xf32>,
    %276 = arith.index_cast %c6_i32 : i32 to index
    %c0_127 = arith.constant 0 : index
    %c0_128 = arith.constant 0 : index
    %277 = vector.load %arg11[%276, %c0_127, %c0_128] : memref<8x2x32xf32, #tpu.memory_space<vmem>>, vector<1x2x32xf32>
    %278 = vector.shape_cast %277 : vector<1x2x32xf32> to vector<2x32xf32>
    %279 = vector.shape_cast %273 : vector<2x32xf32> to vector<1x2x32xf32>
    tpu.vector_store %arg11[%276, %c0_127, %c0_128], %279 {strides = array<i32>} : memref<8x2x32xf32, #tpu.memory_space<vmem>>, vector<1x2x32xf32>,
    %c7_i32 = arith.constant 7 : i32
    %c0_129 = arith.constant 0 : index
    %c0_130 = arith.constant 0 : index
    %280 = vector.load %arg12[%c0_129, %c0_130] : memref<2x32xf32, #tpu.memory_space<vmem>>, vector<2x32xf32>
    %c0_131 = arith.constant 0 : index
    %c0_132 = arith.constant 0 : index
    %281 = vector.load %arg13[%c0_131, %c0_132] : memref<2x32xf32, #tpu.memory_space<vmem>>, vector<2x32xf32>
    %282 = arith.index_cast %c7_i32 : i32 to index
    %c0_133 = arith.constant 0 : index
    %c0_134 = arith.constant 0 : index
    %283 = vector.load %arg10[%282, %c0_133, %c0_134] : memref<8x2x128xf32, #tpu.memory_space<vmem>>, vector<1x2x128xf32>
    %284 = vector.shape_cast %283 : vector<1x2x128xf32> to vector<2x128xf32>
    %cst_135 = arith.constant dense<0.000000e+00> : vector<2x128xf32>
    %285 = tpu.matmul %280, %13, %cst_135 {dimension_numbers = #tpu.dot_dimension_numbers<[1], [0], [0], [1], [0, 0, 1, 1], [], []>} : vector<2x32xf32>, vector<32x128xf32>, vector<2x128xf32> -> vector<2x128xf32>
    %286 = arith.addf %284, %285 : vector<2x128xf32>
    %287 = vector.extract_strided_slice %286 {offsets = [0, 0], sizes = [2, 32], strides = [1, 1]} : vector<2x128xf32> to vector<2x32xf32>
    %288 = arith.negf %287 : vector<2x32xf32>
    %289 = math.exp %288 : vector<2x32xf32>
    %cst_136 = arith.constant 1.000000e+00 : f32
    %290 = vector.broadcast %cst_136 : f32 to vector<2x32xf32>
    %291 = arith.addf %290, %289 : vector<2x32xf32>
    %292 = arith.divf %290, %291 : vector<2x32xf32>
    %293 = vector.extract_strided_slice %286 {offsets = [0, 32], sizes = [2, 32], strides = [1, 1]} : vector<2x128xf32> to vector<2x32xf32>
    %294 = arith.negf %293 : vector<2x32xf32>
    %295 = math.exp %294 : vector<2x32xf32>
    %cst_137 = arith.constant 1.000000e+00 : f32
    %296 = vector.broadcast %cst_137 : f32 to vector<2x32xf32>
    %297 = arith.addf %296, %295 : vector<2x32xf32>
    %298 = arith.divf %296, %297 : vector<2x32xf32>
    %299 = vector.extract_strided_slice %286 {offsets = [0, 64], sizes = [2, 32], strides = [1, 1]} : vector<2x128xf32> to vector<2x32xf32>
    %300 = math.tanh %299 : vector<2x32xf32>
    %301 = vector.extract_strided_slice %286 {offsets = [0, 96], sizes = [2, 32], strides = [1, 1]} : vector<2x128xf32> to vector<2x32xf32>
    %302 = arith.negf %301 : vector<2x32xf32>
    %303 = math.exp %302 : vector<2x32xf32>
    %cst_138 = arith.constant 1.000000e+00 : f32
    %304 = vector.broadcast %cst_138 : f32 to vector<2x32xf32>
    %305 = arith.addf %304, %303 : vector<2x32xf32>
    %306 = arith.divf %304, %305 : vector<2x32xf32>
    %307 = arith.mulf %298, %281 : vector<2x32xf32>
    %308 = arith.mulf %292, %300 : vector<2x32xf32>
    %309 = arith.addf %307, %308 : vector<2x32xf32>
    %310 = math.tanh %309 : vector<2x32xf32>
    %311 = arith.mulf %306, %310 : vector<2x32xf32>
    %c0_139 = arith.constant 0 : index
    %c0_140 = arith.constant 0 : index
    %312 = vector.load %arg13[%c0_139, %c0_140] : memref<2x32xf32, #tpu.memory_space<vmem>>, vector<2x32xf32>
    tpu.vector_store %arg13[%c0_139, %c0_140], %309 {strides = array<i32>} : memref<2x32xf32, #tpu.memory_space<vmem>>, vector<2x32xf32>,
    %c0_141 = arith.constant 0 : index
    %c0_142 = arith.constant 0 : index
    %313 = vector.load %arg12[%c0_141, %c0_142] : memref<2x32xf32, #tpu.memory_space<vmem>>, vector<2x32xf32>
    tpu.vector_store %arg12[%c0_141, %c0_142], %311 {strides = array<i32>} : memref<2x32xf32, #tpu.memory_space<vmem>>, vector<2x32xf32>,
    %314 = arith.index_cast %c7_i32 : i32 to index
    %c0_143 = arith.constant 0 : index
    %c0_144 = arith.constant 0 : index
    %315 = vector.load %arg11[%314, %c0_143, %c0_144] : memref<8x2x32xf32, #tpu.memory_space<vmem>>, vector<1x2x32xf32>
    %316 = vector.shape_cast %315 : vector<1x2x32xf32> to vector<2x32xf32>
    %317 = vector.shape_cast %311 : vector<2x32xf32> to vector<1x2x32xf32>
    tpu.vector_store %arg11[%314, %c0_143, %c0_144], %317 {strides = array<i32>} : memref<8x2x32xf32, #tpu.memory_space<vmem>>, vector<1x2x32xf32>,
    %c8_i32 = arith.constant 8 : i32
    %c0_145 = arith.constant 0 : index
    %c0_146 = arith.constant 0 : index
    %c0_147 = arith.constant 0 : index
    %318 = vector.load %arg11[%c0_145, %c0_146, %c0_147] : memref<8x2x32xf32, #tpu.memory_space<vmem>>, vector<8x2x32xf32>
    %319 = vector.shape_cast %318 : vector<8x2x32xf32> to vector<16x32xf32>
    %c0_148 = arith.constant 0 : index
    %c0_149 = arith.constant 0 : index
    %320 = vector.load %arg4[%c0_148, %c0_149] : memref<32x128xf32, #tpu.memory_space<vmem>>, vector<32x128xf32>
    %cst_150 = arith.constant dense<0.000000e+00> : vector<16x128xf32>
    %321 = tpu.matmul %319, %320, %cst_150 {dimension_numbers = #tpu.dot_dimension_numbers<[1], [0], [0], [1], [0, 0, 1, 1], [], []>} : vector<16x32xf32>, vector<32x128xf32>, vector<16x128xf32> -> vector<16x128xf32>
    %c0_151 = arith.constant 0 : index
    %c0_152 = arith.constant 0 : index
    %322 = vector.load %arg6[%c0_151, %c0_152] : memref<1x128xf32, #tpu.memory_space<vmem>>, vector<1x128xf32>
    %323 = vector.broadcast %322 : vector<1x128xf32> to vector<16x128xf32>
    %324 = arith.addf %321, %323 : vector<16x128xf32>
    %325 = vector.shape_cast %324 : vector<16x128xf32> to vector<8x2x128xf32>
    %c0_153 = arith.constant 0 : index
    %c0_154 = arith.constant 0 : index
    %c0_155 = arith.constant 0 : index
    %326 = vector.load %arg10[%c0_153, %c0_154, %c0_155] : memref<8x2x128xf32, #tpu.memory_space<vmem>>, vector<8x2x128xf32>
    tpu.vector_store %arg10[%c0_153, %c0_154, %c0_155], %325 {strides = array<i32>} : memref<8x2x128xf32, #tpu.memory_space<vmem>>, vector<8x2x128xf32>,
    %cst_156 = arith.constant 0.000000e+00 : f32
    %327 = vector.broadcast %cst_156 : f32 to vector<2x32xf32>
    %c0_157 = arith.constant 0 : index
    %c0_158 = arith.constant 0 : index
    %328 = vector.load %arg12[%c0_157, %c0_158] : memref<2x32xf32, #tpu.memory_space<vmem>>, vector<2x32xf32>
    tpu.vector_store %arg12[%c0_157, %c0_158], %327 {strides = array<i32>} : memref<2x32xf32, #tpu.memory_space<vmem>>, vector<2x32xf32>,
    %cst_159 = arith.constant 0.000000e+00 : f32
    %329 = vector.broadcast %cst_159 : f32 to vector<2x32xf32>
    %c0_160 = arith.constant 0 : index
    %c0_161 = arith.constant 0 : index
    %330 = vector.load %arg13[%c0_160, %c0_161] : memref<2x32xf32, #tpu.memory_space<vmem>>, vector<2x32xf32>
    tpu.vector_store %arg13[%c0_160, %c0_161], %329 {strides = array<i32>} : memref<2x32xf32, #tpu.memory_space<vmem>>, vector<2x32xf32>,
    %c0_162 = arith.constant 0 : index
    %c0_163 = arith.constant 0 : index
    %331 = vector.load %arg5[%c0_162, %c0_163] : memref<32x128xf32, #tpu.memory_space<vmem>>, vector<32x128xf32>
    %c0_i32_164 = arith.constant 0 : i32
    %c0_165 = arith.constant 0 : index
    %c0_166 = arith.constant 0 : index
    %332 = vector.load %arg12[%c0_165, %c0_166] : memref<2x32xf32, #tpu.memory_space<vmem>>, vector<2x32xf32>
    %c0_167 = arith.constant 0 : index
    %c0_168 = arith.constant 0 : index
    %333 = vector.load %arg13[%c0_167, %c0_168] : memref<2x32xf32, #tpu.memory_space<vmem>>, vector<2x32xf32>
    %334 = arith.index_cast %c0_i32_164 : i32 to index
    %c0_169 = arith.constant 0 : index
    %c0_170 = arith.constant 0 : index
    %335 = vector.load %arg10[%334, %c0_169, %c0_170] : memref<8x2x128xf32, #tpu.memory_space<vmem>>, vector<1x2x128xf32>
    %336 = vector.shape_cast %335 : vector<1x2x128xf32> to vector<2x128xf32>
    %cst_171 = arith.constant dense<0.000000e+00> : vector<2x128xf32>
    %337 = tpu.matmul %332, %331, %cst_171 {dimension_numbers = #tpu.dot_dimension_numbers<[1], [0], [0], [1], [0, 0, 1, 1], [], []>} : vector<2x32xf32>, vector<32x128xf32>, vector<2x128xf32> -> vector<2x128xf32>
    %338 = arith.addf %336, %337 : vector<2x128xf32>
    %339 = vector.extract_strided_slice %338 {offsets = [0, 0], sizes = [2, 32], strides = [1, 1]} : vector<2x128xf32> to vector<2x32xf32>
    %340 = arith.negf %339 : vector<2x32xf32>
    %341 = math.exp %340 : vector<2x32xf32>
    %cst_172 = arith.constant 1.000000e+00 : f32
    %342 = vector.broadcast %cst_172 : f32 to vector<2x32xf32>
    %343 = arith.addf %342, %341 : vector<2x32xf32>
    %344 = arith.divf %342, %343 : vector<2x32xf32>
    %345 = vector.extract_strided_slice %338 {offsets = [0, 32], sizes = [2, 32], strides = [1, 1]} : vector<2x128xf32> to vector<2x32xf32>
    %346 = arith.negf %345 : vector<2x32xf32>
    %347 = math.exp %346 : vector<2x32xf32>
    %cst_173 = arith.constant 1.000000e+00 : f32
    %348 = vector.broadcast %cst_173 : f32 to vector<2x32xf32>
    %349 = arith.addf %348, %347 : vector<2x32xf32>
    %350 = arith.divf %348, %349 : vector<2x32xf32>
    %351 = vector.extract_strided_slice %338 {offsets = [0, 64], sizes = [2, 32], strides = [1, 1]} : vector<2x128xf32> to vector<2x32xf32>
    %352 = math.tanh %351 : vector<2x32xf32>
    %353 = vector.extract_strided_slice %338 {offsets = [0, 96], sizes = [2, 32], strides = [1, 1]} : vector<2x128xf32> to vector<2x32xf32>
    %354 = arith.negf %353 : vector<2x32xf32>
    %355 = math.exp %354 : vector<2x32xf32>
    %cst_174 = arith.constant 1.000000e+00 : f32
    %356 = vector.broadcast %cst_174 : f32 to vector<2x32xf32>
    %357 = arith.addf %356, %355 : vector<2x32xf32>
    %358 = arith.divf %356, %357 : vector<2x32xf32>
    %359 = arith.mulf %350, %333 : vector<2x32xf32>
    %360 = arith.mulf %344, %352 : vector<2x32xf32>
    %361 = arith.addf %359, %360 : vector<2x32xf32>
    %362 = math.tanh %361 : vector<2x32xf32>
    %363 = arith.mulf %358, %362 : vector<2x32xf32>
    %c0_175 = arith.constant 0 : index
    %c0_176 = arith.constant 0 : index
    %364 = vector.load %arg13[%c0_175, %c0_176] : memref<2x32xf32, #tpu.memory_space<vmem>>, vector<2x32xf32>
    tpu.vector_store %arg13[%c0_175, %c0_176], %361 {strides = array<i32>} : memref<2x32xf32, #tpu.memory_space<vmem>>, vector<2x32xf32>,
    %c0_177 = arith.constant 0 : index
    %c0_178 = arith.constant 0 : index
    %365 = vector.load %arg12[%c0_177, %c0_178] : memref<2x32xf32, #tpu.memory_space<vmem>>, vector<2x32xf32>
    tpu.vector_store %arg12[%c0_177, %c0_178], %363 {strides = array<i32>} : memref<2x32xf32, #tpu.memory_space<vmem>>, vector<2x32xf32>,
    %366 = arith.index_cast %c0_i32_164 : i32 to index
    %c0_179 = arith.constant 0 : index
    %c0_180 = arith.constant 0 : index
    %367 = vector.load %arg11[%366, %c0_179, %c0_180] : memref<8x2x32xf32, #tpu.memory_space<vmem>>, vector<1x2x32xf32>
    %368 = vector.shape_cast %367 : vector<1x2x32xf32> to vector<2x32xf32>
    %369 = vector.shape_cast %363 : vector<2x32xf32> to vector<1x2x32xf32>
    tpu.vector_store %arg11[%366, %c0_179, %c0_180], %369 {strides = array<i32>} : memref<8x2x32xf32, #tpu.memory_space<vmem>>, vector<1x2x32xf32>,
    %c1_i32_181 = arith.constant 1 : i32
    %c0_182 = arith.constant 0 : index
    %c0_183 = arith.constant 0 : index
    %370 = vector.load %arg12[%c0_182, %c0_183] : memref<2x32xf32, #tpu.memory_space<vmem>>, vector<2x32xf32>
    %c0_184 = arith.constant 0 : index
    %c0_185 = arith.constant 0 : index
    %371 = vector.load %arg13[%c0_184, %c0_185] : memref<2x32xf32, #tpu.memory_space<vmem>>, vector<2x32xf32>
    %372 = arith.index_cast %c1_i32_181 : i32 to index
    %c0_186 = arith.constant 0 : index
    %c0_187 = arith.constant 0 : index
    %373 = vector.load %arg10[%372, %c0_186, %c0_187] : memref<8x2x128xf32, #tpu.memory_space<vmem>>, vector<1x2x128xf32>
    %374 = vector.shape_cast %373 : vector<1x2x128xf32> to vector<2x128xf32>
    %cst_188 = arith.constant dense<0.000000e+00> : vector<2x128xf32>
    %375 = tpu.matmul %370, %331, %cst_188 {dimension_numbers = #tpu.dot_dimension_numbers<[1], [0], [0], [1], [0, 0, 1, 1], [], []>} : vector<2x32xf32>, vector<32x128xf32>, vector<2x128xf32> -> vector<2x128xf32>
    %376 = arith.addf %374, %375 : vector<2x128xf32>
    %377 = vector.extract_strided_slice %376 {offsets = [0, 0], sizes = [2, 32], strides = [1, 1]} : vector<2x128xf32> to vector<2x32xf32>
    %378 = arith.negf %377 : vector<2x32xf32>
    %379 = math.exp %378 : vector<2x32xf32>
    %cst_189 = arith.constant 1.000000e+00 : f32
    %380 = vector.broadcast %cst_189 : f32 to vector<2x32xf32>
    %381 = arith.addf %380, %379 : vector<2x32xf32>
    %382 = arith.divf %380, %381 : vector<2x32xf32>
    %383 = vector.extract_strided_slice %376 {offsets = [0, 32], sizes = [2, 32], strides = [1, 1]} : vector<2x128xf32> to vector<2x32xf32>
    %384 = arith.negf %383 : vector<2x32xf32>
    %385 = math.exp %384 : vector<2x32xf32>
    %cst_190 = arith.constant 1.000000e+00 : f32
    %386 = vector.broadcast %cst_190 : f32 to vector<2x32xf32>
    %387 = arith.addf %386, %385 : vector<2x32xf32>
    %388 = arith.divf %386, %387 : vector<2x32xf32>
    %389 = vector.extract_strided_slice %376 {offsets = [0, 64], sizes = [2, 32], strides = [1, 1]} : vector<2x128xf32> to vector<2x32xf32>
    %390 = math.tanh %389 : vector<2x32xf32>
    %391 = vector.extract_strided_slice %376 {offsets = [0, 96], sizes = [2, 32], strides = [1, 1]} : vector<2x128xf32> to vector<2x32xf32>
    %392 = arith.negf %391 : vector<2x32xf32>
    %393 = math.exp %392 : vector<2x32xf32>
    %cst_191 = arith.constant 1.000000e+00 : f32
    %394 = vector.broadcast %cst_191 : f32 to vector<2x32xf32>
    %395 = arith.addf %394, %393 : vector<2x32xf32>
    %396 = arith.divf %394, %395 : vector<2x32xf32>
    %397 = arith.mulf %388, %371 : vector<2x32xf32>
    %398 = arith.mulf %382, %390 : vector<2x32xf32>
    %399 = arith.addf %397, %398 : vector<2x32xf32>
    %400 = math.tanh %399 : vector<2x32xf32>
    %401 = arith.mulf %396, %400 : vector<2x32xf32>
    %c0_192 = arith.constant 0 : index
    %c0_193 = arith.constant 0 : index
    %402 = vector.load %arg13[%c0_192, %c0_193] : memref<2x32xf32, #tpu.memory_space<vmem>>, vector<2x32xf32>
    tpu.vector_store %arg13[%c0_192, %c0_193], %399 {strides = array<i32>} : memref<2x32xf32, #tpu.memory_space<vmem>>, vector<2x32xf32>,
    %c0_194 = arith.constant 0 : index
    %c0_195 = arith.constant 0 : index
    %403 = vector.load %arg12[%c0_194, %c0_195] : memref<2x32xf32, #tpu.memory_space<vmem>>, vector<2x32xf32>
    tpu.vector_store %arg12[%c0_194, %c0_195], %401 {strides = array<i32>} : memref<2x32xf32, #tpu.memory_space<vmem>>, vector<2x32xf32>,
    %404 = arith.index_cast %c1_i32_181 : i32 to index
    %c0_196 = arith.constant 0 : index
    %c0_197 = arith.constant 0 : index
    %405 = vector.load %arg11[%404, %c0_196, %c0_197] : memref<8x2x32xf32, #tpu.memory_space<vmem>>, vector<1x2x32xf32>
    %406 = vector.shape_cast %405 : vector<1x2x32xf32> to vector<2x32xf32>
    %407 = vector.shape_cast %401 : vector<2x32xf32> to vector<1x2x32xf32>
    tpu.vector_store %arg11[%404, %c0_196, %c0_197], %407 {strides = array<i32>} : memref<8x2x32xf32, #tpu.memory_space<vmem>>, vector<1x2x32xf32>,
    %c2_i32_198 = arith.constant 2 : i32
    %c0_199 = arith.constant 0 : index
    %c0_200 = arith.constant 0 : index
    %408 = vector.load %arg12[%c0_199, %c0_200] : memref<2x32xf32, #tpu.memory_space<vmem>>, vector<2x32xf32>
    %c0_201 = arith.constant 0 : index
    %c0_202 = arith.constant 0 : index
    %409 = vector.load %arg13[%c0_201, %c0_202] : memref<2x32xf32, #tpu.memory_space<vmem>>, vector<2x32xf32>
    %410 = arith.index_cast %c2_i32_198 : i32 to index
    %c0_203 = arith.constant 0 : index
    %c0_204 = arith.constant 0 : index
    %411 = vector.load %arg10[%410, %c0_203, %c0_204] : memref<8x2x128xf32, #tpu.memory_space<vmem>>, vector<1x2x128xf32>
    %412 = vector.shape_cast %411 : vector<1x2x128xf32> to vector<2x128xf32>
    %cst_205 = arith.constant dense<0.000000e+00> : vector<2x128xf32>
    %413 = tpu.matmul %408, %331, %cst_205 {dimension_numbers = #tpu.dot_dimension_numbers<[1], [0], [0], [1], [0, 0, 1, 1], [], []>} : vector<2x32xf32>, vector<32x128xf32>, vector<2x128xf32> -> vector<2x128xf32>
    %414 = arith.addf %412, %413 : vector<2x128xf32>
    %415 = vector.extract_strided_slice %414 {offsets = [0, 0], sizes = [2, 32], strides = [1, 1]} : vector<2x128xf32> to vector<2x32xf32>
    %416 = arith.negf %415 : vector<2x32xf32>
    %417 = math.exp %416 : vector<2x32xf32>
    %cst_206 = arith.constant 1.000000e+00 : f32
    %418 = vector.broadcast %cst_206 : f32 to vector<2x32xf32>
    %419 = arith.addf %418, %417 : vector<2x32xf32>
    %420 = arith.divf %418, %419 : vector<2x32xf32>
    %421 = vector.extract_strided_slice %414 {offsets = [0, 32], sizes = [2, 32], strides = [1, 1]} : vector<2x128xf32> to vector<2x32xf32>
    %422 = arith.negf %421 : vector<2x32xf32>
    %423 = math.exp %422 : vector<2x32xf32>
    %cst_207 = arith.constant 1.000000e+00 : f32
    %424 = vector.broadcast %cst_207 : f32 to vector<2x32xf32>
    %425 = arith.addf %424, %423 : vector<2x32xf32>
    %426 = arith.divf %424, %425 : vector<2x32xf32>
    %427 = vector.extract_strided_slice %414 {offsets = [0, 64], sizes = [2, 32], strides = [1, 1]} : vector<2x128xf32> to vector<2x32xf32>
    %428 = math.tanh %427 : vector<2x32xf32>
    %429 = vector.extract_strided_slice %414 {offsets = [0, 96], sizes = [2, 32], strides = [1, 1]} : vector<2x128xf32> to vector<2x32xf32>
    %430 = arith.negf %429 : vector<2x32xf32>
    %431 = math.exp %430 : vector<2x32xf32>
    %cst_208 = arith.constant 1.000000e+00 : f32
    %432 = vector.broadcast %cst_208 : f32 to vector<2x32xf32>
    %433 = arith.addf %432, %431 : vector<2x32xf32>
    %434 = arith.divf %432, %433 : vector<2x32xf32>
    %435 = arith.mulf %426, %409 : vector<2x32xf32>
    %436 = arith.mulf %420, %428 : vector<2x32xf32>
    %437 = arith.addf %435, %436 : vector<2x32xf32>
    %438 = math.tanh %437 : vector<2x32xf32>
    %439 = arith.mulf %434, %438 : vector<2x32xf32>
    %c0_209 = arith.constant 0 : index
    %c0_210 = arith.constant 0 : index
    %440 = vector.load %arg13[%c0_209, %c0_210] : memref<2x32xf32, #tpu.memory_space<vmem>>, vector<2x32xf32>
    tpu.vector_store %arg13[%c0_209, %c0_210], %437 {strides = array<i32>} : memref<2x32xf32, #tpu.memory_space<vmem>>, vector<2x32xf32>,
    %c0_211 = arith.constant 0 : index
    %c0_212 = arith.constant 0 : index
    %441 = vector.load %arg12[%c0_211, %c0_212] : memref<2x32xf32, #tpu.memory_space<vmem>>, vector<2x32xf32>
    tpu.vector_store %arg12[%c0_211, %c0_212], %439 {strides = array<i32>} : memref<2x32xf32, #tpu.memory_space<vmem>>, vector<2x32xf32>,
    %442 = arith.index_cast %c2_i32_198 : i32 to index
    %c0_213 = arith.constant 0 : index
    %c0_214 = arith.constant 0 : index
    %443 = vector.load %arg11[%442, %c0_213, %c0_214] : memref<8x2x32xf32, #tpu.memory_space<vmem>>, vector<1x2x32xf32>
    %444 = vector.shape_cast %443 : vector<1x2x32xf32> to vector<2x32xf32>
    %445 = vector.shape_cast %439 : vector<2x32xf32> to vector<1x2x32xf32>
    tpu.vector_store %arg11[%442, %c0_213, %c0_214], %445 {strides = array<i32>} : memref<8x2x32xf32, #tpu.memory_space<vmem>>, vector<1x2x32xf32>,
    %c3_i32_215 = arith.constant 3 : i32
    %c0_216 = arith.constant 0 : index
    %c0_217 = arith.constant 0 : index
    %446 = vector.load %arg12[%c0_216, %c0_217] : memref<2x32xf32, #tpu.memory_space<vmem>>, vector<2x32xf32>
    %c0_218 = arith.constant 0 : index
    %c0_219 = arith.constant 0 : index
    %447 = vector.load %arg13[%c0_218, %c0_219] : memref<2x32xf32, #tpu.memory_space<vmem>>, vector<2x32xf32>
    %448 = arith.index_cast %c3_i32_215 : i32 to index
    %c0_220 = arith.constant 0 : index
    %c0_221 = arith.constant 0 : index
    %449 = vector.load %arg10[%448, %c0_220, %c0_221] : memref<8x2x128xf32, #tpu.memory_space<vmem>>, vector<1x2x128xf32>
    %450 = vector.shape_cast %449 : vector<1x2x128xf32> to vector<2x128xf32>
    %cst_222 = arith.constant dense<0.000000e+00> : vector<2x128xf32>
    %451 = tpu.matmul %446, %331, %cst_222 {dimension_numbers = #tpu.dot_dimension_numbers<[1], [0], [0], [1], [0, 0, 1, 1], [], []>} : vector<2x32xf32>, vector<32x128xf32>, vector<2x128xf32> -> vector<2x128xf32>
    %452 = arith.addf %450, %451 : vector<2x128xf32>
    %453 = vector.extract_strided_slice %452 {offsets = [0, 0], sizes = [2, 32], strides = [1, 1]} : vector<2x128xf32> to vector<2x32xf32>
    %454 = arith.negf %453 : vector<2x32xf32>
    %455 = math.exp %454 : vector<2x32xf32>
    %cst_223 = arith.constant 1.000000e+00 : f32
    %456 = vector.broadcast %cst_223 : f32 to vector<2x32xf32>
    %457 = arith.addf %456, %455 : vector<2x32xf32>
    %458 = arith.divf %456, %457 : vector<2x32xf32>
    %459 = vector.extract_strided_slice %452 {offsets = [0, 32], sizes = [2, 32], strides = [1, 1]} : vector<2x128xf32> to vector<2x32xf32>
    %460 = arith.negf %459 : vector<2x32xf32>
    %461 = math.exp %460 : vector<2x32xf32>
    %cst_224 = arith.constant 1.000000e+00 : f32
    %462 = vector.broadcast %cst_224 : f32 to vector<2x32xf32>
    %463 = arith.addf %462, %461 : vector<2x32xf32>
    %464 = arith.divf %462, %463 : vector<2x32xf32>
    %465 = vector.extract_strided_slice %452 {offsets = [0, 64], sizes = [2, 32], strides = [1, 1]} : vector<2x128xf32> to vector<2x32xf32>
    %466 = math.tanh %465 : vector<2x32xf32>
    %467 = vector.extract_strided_slice %452 {offsets = [0, 96], sizes = [2, 32], strides = [1, 1]} : vector<2x128xf32> to vector<2x32xf32>
    %468 = arith.negf %467 : vector<2x32xf32>
    %469 = math.exp %468 : vector<2x32xf32>
    %cst_225 = arith.constant 1.000000e+00 : f32
    %470 = vector.broadcast %cst_225 : f32 to vector<2x32xf32>
    %471 = arith.addf %470, %469 : vector<2x32xf32>
    %472 = arith.divf %470, %471 : vector<2x32xf32>
    %473 = arith.mulf %464, %447 : vector<2x32xf32>
    %474 = arith.mulf %458, %466 : vector<2x32xf32>
    %475 = arith.addf %473, %474 : vector<2x32xf32>
    %476 = math.tanh %475 : vector<2x32xf32>
    %477 = arith.mulf %472, %476 : vector<2x32xf32>
    %c0_226 = arith.constant 0 : index
    %c0_227 = arith.constant 0 : index
    %478 = vector.load %arg13[%c0_226, %c0_227] : memref<2x32xf32, #tpu.memory_space<vmem>>, vector<2x32xf32>
    tpu.vector_store %arg13[%c0_226, %c0_227], %475 {strides = array<i32>} : memref<2x32xf32, #tpu.memory_space<vmem>>, vector<2x32xf32>,
    %c0_228 = arith.constant 0 : index
    %c0_229 = arith.constant 0 : index
    %479 = vector.load %arg12[%c0_228, %c0_229] : memref<2x32xf32, #tpu.memory_space<vmem>>, vector<2x32xf32>
    tpu.vector_store %arg12[%c0_228, %c0_229], %477 {strides = array<i32>} : memref<2x32xf32, #tpu.memory_space<vmem>>, vector<2x32xf32>,
    %480 = arith.index_cast %c3_i32_215 : i32 to index
    %c0_230 = arith.constant 0 : index
    %c0_231 = arith.constant 0 : index
    %481 = vector.load %arg11[%480, %c0_230, %c0_231] : memref<8x2x32xf32, #tpu.memory_space<vmem>>, vector<1x2x32xf32>
    %482 = vector.shape_cast %481 : vector<1x2x32xf32> to vector<2x32xf32>
    %483 = vector.shape_cast %477 : vector<2x32xf32> to vector<1x2x32xf32>
    tpu.vector_store %arg11[%480, %c0_230, %c0_231], %483 {strides = array<i32>} : memref<8x2x32xf32, #tpu.memory_space<vmem>>, vector<1x2x32xf32>,
    %c4_i32_232 = arith.constant 4 : i32
    %c0_233 = arith.constant 0 : index
    %c0_234 = arith.constant 0 : index
    %484 = vector.load %arg12[%c0_233, %c0_234] : memref<2x32xf32, #tpu.memory_space<vmem>>, vector<2x32xf32>
    %c0_235 = arith.constant 0 : index
    %c0_236 = arith.constant 0 : index
    %485 = vector.load %arg13[%c0_235, %c0_236] : memref<2x32xf32, #tpu.memory_space<vmem>>, vector<2x32xf32>
    %486 = arith.index_cast %c4_i32_232 : i32 to index
    %c0_237 = arith.constant 0 : index
    %c0_238 = arith.constant 0 : index
    %487 = vector.load %arg10[%486, %c0_237, %c0_238] : memref<8x2x128xf32, #tpu.memory_space<vmem>>, vector<1x2x128xf32>
    %488 = vector.shape_cast %487 : vector<1x2x128xf32> to vector<2x128xf32>
    %cst_239 = arith.constant dense<0.000000e+00> : vector<2x128xf32>
    %489 = tpu.matmul %484, %331, %cst_239 {dimension_numbers = #tpu.dot_dimension_numbers<[1], [0], [0], [1], [0, 0, 1, 1], [], []>} : vector<2x32xf32>, vector<32x128xf32>, vector<2x128xf32> -> vector<2x128xf32>
    %490 = arith.addf %488, %489 : vector<2x128xf32>
    %491 = vector.extract_strided_slice %490 {offsets = [0, 0], sizes = [2, 32], strides = [1, 1]} : vector<2x128xf32> to vector<2x32xf32>
    %492 = arith.negf %491 : vector<2x32xf32>
    %493 = math.exp %492 : vector<2x32xf32>
    %cst_240 = arith.constant 1.000000e+00 : f32
    %494 = vector.broadcast %cst_240 : f32 to vector<2x32xf32>
    %495 = arith.addf %494, %493 : vector<2x32xf32>
    %496 = arith.divf %494, %495 : vector<2x32xf32>
    %497 = vector.extract_strided_slice %490 {offsets = [0, 32], sizes = [2, 32], strides = [1, 1]} : vector<2x128xf32> to vector<2x32xf32>
    %498 = arith.negf %497 : vector<2x32xf32>
    %499 = math.exp %498 : vector<2x32xf32>
    %cst_241 = arith.constant 1.000000e+00 : f32
    %500 = vector.broadcast %cst_241 : f32 to vector<2x32xf32>
    %501 = arith.addf %500, %499 : vector<2x32xf32>
    %502 = arith.divf %500, %501 : vector<2x32xf32>
    %503 = vector.extract_strided_slice %490 {offsets = [0, 64], sizes = [2, 32], strides = [1, 1]} : vector<2x128xf32> to vector<2x32xf32>
    %504 = math.tanh %503 : vector<2x32xf32>
    %505 = vector.extract_strided_slice %490 {offsets = [0, 96], sizes = [2, 32], strides = [1, 1]} : vector<2x128xf32> to vector<2x32xf32>
    %506 = arith.negf %505 : vector<2x32xf32>
    %507 = math.exp %506 : vector<2x32xf32>
    %cst_242 = arith.constant 1.000000e+00 : f32
    %508 = vector.broadcast %cst_242 : f32 to vector<2x32xf32>
    %509 = arith.addf %508, %507 : vector<2x32xf32>
    %510 = arith.divf %508, %509 : vector<2x32xf32>
    %511 = arith.mulf %502, %485 : vector<2x32xf32>
    %512 = arith.mulf %496, %504 : vector<2x32xf32>
    %513 = arith.addf %511, %512 : vector<2x32xf32>
    %514 = math.tanh %513 : vector<2x32xf32>
    %515 = arith.mulf %510, %514 : vector<2x32xf32>
    %c0_243 = arith.constant 0 : index
    %c0_244 = arith.constant 0 : index
    %516 = vector.load %arg13[%c0_243, %c0_244] : memref<2x32xf32, #tpu.memory_space<vmem>>, vector<2x32xf32>
    tpu.vector_store %arg13[%c0_243, %c0_244], %513 {strides = array<i32>} : memref<2x32xf32, #tpu.memory_space<vmem>>, vector<2x32xf32>,
    %c0_245 = arith.constant 0 : index
    %c0_246 = arith.constant 0 : index
    %517 = vector.load %arg12[%c0_245, %c0_246] : memref<2x32xf32, #tpu.memory_space<vmem>>, vector<2x32xf32>
    tpu.vector_store %arg12[%c0_245, %c0_246], %515 {strides = array<i32>} : memref<2x32xf32, #tpu.memory_space<vmem>>, vector<2x32xf32>,
    %518 = arith.index_cast %c4_i32_232 : i32 to index
    %c0_247 = arith.constant 0 : index
    %c0_248 = arith.constant 0 : index
    %519 = vector.load %arg11[%518, %c0_247, %c0_248] : memref<8x2x32xf32, #tpu.memory_space<vmem>>, vector<1x2x32xf32>
    %520 = vector.shape_cast %519 : vector<1x2x32xf32> to vector<2x32xf32>
    %521 = vector.shape_cast %515 : vector<2x32xf32> to vector<1x2x32xf32>
    tpu.vector_store %arg11[%518, %c0_247, %c0_248], %521 {strides = array<i32>} : memref<8x2x32xf32, #tpu.memory_space<vmem>>, vector<1x2x32xf32>,
    %c5_i32_249 = arith.constant 5 : i32
    %c0_250 = arith.constant 0 : index
    %c0_251 = arith.constant 0 : index
    %522 = vector.load %arg12[%c0_250, %c0_251] : memref<2x32xf32, #tpu.memory_space<vmem>>, vector<2x32xf32>
    %c0_252 = arith.constant 0 : index
    %c0_253 = arith.constant 0 : index
    %523 = vector.load %arg13[%c0_252, %c0_253] : memref<2x32xf32, #tpu.memory_space<vmem>>, vector<2x32xf32>
    %524 = arith.index_cast %c5_i32_249 : i32 to index
    %c0_254 = arith.constant 0 : index
    %c0_255 = arith.constant 0 : index
    %525 = vector.load %arg10[%524, %c0_254, %c0_255] : memref<8x2x128xf32, #tpu.memory_space<vmem>>, vector<1x2x128xf32>
    %526 = vector.shape_cast %525 : vector<1x2x128xf32> to vector<2x128xf32>
    %cst_256 = arith.constant dense<0.000000e+00> : vector<2x128xf32>
    %527 = tpu.matmul %522, %331, %cst_256 {dimension_numbers = #tpu.dot_dimension_numbers<[1], [0], [0], [1], [0, 0, 1, 1], [], []>} : vector<2x32xf32>, vector<32x128xf32>, vector<2x128xf32> -> vector<2x128xf32>
    %528 = arith.addf %526, %527 : vector<2x128xf32>
    %529 = vector.extract_strided_slice %528 {offsets = [0, 0], sizes = [2, 32], strides = [1, 1]} : vector<2x128xf32> to vector<2x32xf32>
    %530 = arith.negf %529 : vector<2x32xf32>
    %531 = math.exp %530 : vector<2x32xf32>
    %cst_257 = arith.constant 1.000000e+00 : f32
    %532 = vector.broadcast %cst_257 : f32 to vector<2x32xf32>
    %533 = arith.addf %532, %531 : vector<2x32xf32>
    %534 = arith.divf %532, %533 : vector<2x32xf32>
    %535 = vector.extract_strided_slice %528 {offsets = [0, 32], sizes = [2, 32], strides = [1, 1]} : vector<2x128xf32> to vector<2x32xf32>
    %536 = arith.negf %535 : vector<2x32xf32>
    %537 = math.exp %536 : vector<2x32xf32>
    %cst_258 = arith.constant 1.000000e+00 : f32
    %538 = vector.broadcast %cst_258 : f32 to vector<2x32xf32>
    %539 = arith.addf %538, %537 : vector<2x32xf32>
    %540 = arith.divf %538, %539 : vector<2x32xf32>
    %541 = vector.extract_strided_slice %528 {offsets = [0, 64], sizes = [2, 32], strides = [1, 1]} : vector<2x128xf32> to vector<2x32xf32>
    %542 = math.tanh %541 : vector<2x32xf32>
    %543 = vector.extract_strided_slice %528 {offsets = [0, 96], sizes = [2, 32], strides = [1, 1]} : vector<2x128xf32> to vector<2x32xf32>
    %544 = arith.negf %543 : vector<2x32xf32>
    %545 = math.exp %544 : vector<2x32xf32>
    %cst_259 = arith.constant 1.000000e+00 : f32
    %546 = vector.broadcast %cst_259 : f32 to vector<2x32xf32>
    %547 = arith.addf %546, %545 : vector<2x32xf32>
    %548 = arith.divf %546, %547 : vector<2x32xf32>
    %549 = arith.mulf %540, %523 : vector<2x32xf32>
    %550 = arith.mulf %534, %542 : vector<2x32xf32>
    %551 = arith.addf %549, %550 : vector<2x32xf32>
    %552 = math.tanh %551 : vector<2x32xf32>
    %553 = arith.mulf %548, %552 : vector<2x32xf32>
    %c0_260 = arith.constant 0 : index
    %c0_261 = arith.constant 0 : index
    %554 = vector.load %arg13[%c0_260, %c0_261] : memref<2x32xf32, #tpu.memory_space<vmem>>, vector<2x32xf32>
    tpu.vector_store %arg13[%c0_260, %c0_261], %551 {strides = array<i32>} : memref<2x32xf32, #tpu.memory_space<vmem>>, vector<2x32xf32>,
    %c0_262 = arith.constant 0 : index
    %c0_263 = arith.constant 0 : index
    %555 = vector.load %arg12[%c0_262, %c0_263] : memref<2x32xf32, #tpu.memory_space<vmem>>, vector<2x32xf32>
    tpu.vector_store %arg12[%c0_262, %c0_263], %553 {strides = array<i32>} : memref<2x32xf32, #tpu.memory_space<vmem>>, vector<2x32xf32>,
    %556 = arith.index_cast %c5_i32_249 : i32 to index
    %c0_264 = arith.constant 0 : index
    %c0_265 = arith.constant 0 : index
    %557 = vector.load %arg11[%556, %c0_264, %c0_265] : memref<8x2x32xf32, #tpu.memory_space<vmem>>, vector<1x2x32xf32>
    %558 = vector.shape_cast %557 : vector<1x2x32xf32> to vector<2x32xf32>
    %559 = vector.shape_cast %553 : vector<2x32xf32> to vector<1x2x32xf32>
    tpu.vector_store %arg11[%556, %c0_264, %c0_265], %559 {strides = array<i32>} : memref<8x2x32xf32, #tpu.memory_space<vmem>>, vector<1x2x32xf32>,
    %c6_i32_266 = arith.constant 6 : i32
    %c0_267 = arith.constant 0 : index
    %c0_268 = arith.constant 0 : index
    %560 = vector.load %arg12[%c0_267, %c0_268] : memref<2x32xf32, #tpu.memory_space<vmem>>, vector<2x32xf32>
    %c0_269 = arith.constant 0 : index
    %c0_270 = arith.constant 0 : index
    %561 = vector.load %arg13[%c0_269, %c0_270] : memref<2x32xf32, #tpu.memory_space<vmem>>, vector<2x32xf32>
    %562 = arith.index_cast %c6_i32_266 : i32 to index
    %c0_271 = arith.constant 0 : index
    %c0_272 = arith.constant 0 : index
    %563 = vector.load %arg10[%562, %c0_271, %c0_272] : memref<8x2x128xf32, #tpu.memory_space<vmem>>, vector<1x2x128xf32>
    %564 = vector.shape_cast %563 : vector<1x2x128xf32> to vector<2x128xf32>
    %cst_273 = arith.constant dense<0.000000e+00> : vector<2x128xf32>
    %565 = tpu.matmul %560, %331, %cst_273 {dimension_numbers = #tpu.dot_dimension_numbers<[1], [0], [0], [1], [0, 0, 1, 1], [], []>} : vector<2x32xf32>, vector<32x128xf32>, vector<2x128xf32> -> vector<2x128xf32>
    %566 = arith.addf %564, %565 : vector<2x128xf32>
    %567 = vector.extract_strided_slice %566 {offsets = [0, 0], sizes = [2, 32], strides = [1, 1]} : vector<2x128xf32> to vector<2x32xf32>
    %568 = arith.negf %567 : vector<2x32xf32>
    %569 = math.exp %568 : vector<2x32xf32>
    %cst_274 = arith.constant 1.000000e+00 : f32
    %570 = vector.broadcast %cst_274 : f32 to vector<2x32xf32>
    %571 = arith.addf %570, %569 : vector<2x32xf32>
    %572 = arith.divf %570, %571 : vector<2x32xf32>
    %573 = vector.extract_strided_slice %566 {offsets = [0, 32], sizes = [2, 32], strides = [1, 1]} : vector<2x128xf32> to vector<2x32xf32>
    %574 = arith.negf %573 : vector<2x32xf32>
    %575 = math.exp %574 : vector<2x32xf32>
    %cst_275 = arith.constant 1.000000e+00 : f32
    %576 = vector.broadcast %cst_275 : f32 to vector<2x32xf32>
    %577 = arith.addf %576, %575 : vector<2x32xf32>
    %578 = arith.divf %576, %577 : vector<2x32xf32>
    %579 = vector.extract_strided_slice %566 {offsets = [0, 64], sizes = [2, 32], strides = [1, 1]} : vector<2x128xf32> to vector<2x32xf32>
    %580 = math.tanh %579 : vector<2x32xf32>
    %581 = vector.extract_strided_slice %566 {offsets = [0, 96], sizes = [2, 32], strides = [1, 1]} : vector<2x128xf32> to vector<2x32xf32>
    %582 = arith.negf %581 : vector<2x32xf32>
    %583 = math.exp %582 : vector<2x32xf32>
    %cst_276 = arith.constant 1.000000e+00 : f32
    %584 = vector.broadcast %cst_276 : f32 to vector<2x32xf32>
    %585 = arith.addf %584, %583 : vector<2x32xf32>
    %586 = arith.divf %584, %585 : vector<2x32xf32>
    %587 = arith.mulf %578, %561 : vector<2x32xf32>
    %588 = arith.mulf %572, %580 : vector<2x32xf32>
    %589 = arith.addf %587, %588 : vector<2x32xf32>
    %590 = math.tanh %589 : vector<2x32xf32>
    %591 = arith.mulf %586, %590 : vector<2x32xf32>
    %c0_277 = arith.constant 0 : index
    %c0_278 = arith.constant 0 : index
    %592 = vector.load %arg13[%c0_277, %c0_278] : memref<2x32xf32, #tpu.memory_space<vmem>>, vector<2x32xf32>
    tpu.vector_store %arg13[%c0_277, %c0_278], %589 {strides = array<i32>} : memref<2x32xf32, #tpu.memory_space<vmem>>, vector<2x32xf32>,
    %c0_279 = arith.constant 0 : index
    %c0_280 = arith.constant 0 : index
    %593 = vector.load %arg12[%c0_279, %c0_280] : memref<2x32xf32, #tpu.memory_space<vmem>>, vector<2x32xf32>
    tpu.vector_store %arg12[%c0_279, %c0_280], %591 {strides = array<i32>} : memref<2x32xf32, #tpu.memory_space<vmem>>, vector<2x32xf32>,
    %594 = arith.index_cast %c6_i32_266 : i32 to index
    %c0_281 = arith.constant 0 : index
    %c0_282 = arith.constant 0 : index
    %595 = vector.load %arg11[%594, %c0_281, %c0_282] : memref<8x2x32xf32, #tpu.memory_space<vmem>>, vector<1x2x32xf32>
    %596 = vector.shape_cast %595 : vector<1x2x32xf32> to vector<2x32xf32>
    %597 = vector.shape_cast %591 : vector<2x32xf32> to vector<1x2x32xf32>
    tpu.vector_store %arg11[%594, %c0_281, %c0_282], %597 {strides = array<i32>} : memref<8x2x32xf32, #tpu.memory_space<vmem>>, vector<1x2x32xf32>,
    %c7_i32_283 = arith.constant 7 : i32
    %c0_284 = arith.constant 0 : index
    %c0_285 = arith.constant 0 : index
    %598 = vector.load %arg12[%c0_284, %c0_285] : memref<2x32xf32, #tpu.memory_space<vmem>>, vector<2x32xf32>
    %c0_286 = arith.constant 0 : index
    %c0_287 = arith.constant 0 : index
    %599 = vector.load %arg13[%c0_286, %c0_287] : memref<2x32xf32, #tpu.memory_space<vmem>>, vector<2x32xf32>
    %600 = arith.index_cast %c7_i32_283 : i32 to index
    %c0_288 = arith.constant 0 : index
    %c0_289 = arith.constant 0 : index
    %601 = vector.load %arg10[%600, %c0_288, %c0_289] : memref<8x2x128xf32, #tpu.memory_space<vmem>>, vector<1x2x128xf32>
    %602 = vector.shape_cast %601 : vector<1x2x128xf32> to vector<2x128xf32>
    %cst_290 = arith.constant dense<0.000000e+00> : vector<2x128xf32>
    %603 = tpu.matmul %598, %331, %cst_290 {dimension_numbers = #tpu.dot_dimension_numbers<[1], [0], [0], [1], [0, 0, 1, 1], [], []>} : vector<2x32xf32>, vector<32x128xf32>, vector<2x128xf32> -> vector<2x128xf32>
    %604 = arith.addf %602, %603 : vector<2x128xf32>
    %605 = vector.extract_strided_slice %604 {offsets = [0, 0], sizes = [2, 32], strides = [1, 1]} : vector<2x128xf32> to vector<2x32xf32>
    %606 = arith.negf %605 : vector<2x32xf32>
    %607 = math.exp %606 : vector<2x32xf32>
    %cst_291 = arith.constant 1.000000e+00 : f32
    %608 = vector.broadcast %cst_291 : f32 to vector<2x32xf32>
    %609 = arith.addf %608, %607 : vector<2x32xf32>
    %610 = arith.divf %608, %609 : vector<2x32xf32>
    %611 = vector.extract_strided_slice %604 {offsets = [0, 32], sizes = [2, 32], strides = [1, 1]} : vector<2x128xf32> to vector<2x32xf32>
    %612 = arith.negf %611 : vector<2x32xf32>
    %613 = math.exp %612 : vector<2x32xf32>
    %cst_292 = arith.constant 1.000000e+00 : f32
    %614 = vector.broadcast %cst_292 : f32 to vector<2x32xf32>
    %615 = arith.addf %614, %613 : vector<2x32xf32>
    %616 = arith.divf %614, %615 : vector<2x32xf32>
    %617 = vector.extract_strided_slice %604 {offsets = [0, 64], sizes = [2, 32], strides = [1, 1]} : vector<2x128xf32> to vector<2x32xf32>
    %618 = math.tanh %617 : vector<2x32xf32>
    %619 = vector.extract_strided_slice %604 {offsets = [0, 96], sizes = [2, 32], strides = [1, 1]} : vector<2x128xf32> to vector<2x32xf32>
    %620 = arith.negf %619 : vector<2x32xf32>
    %621 = math.exp %620 : vector<2x32xf32>
    %cst_293 = arith.constant 1.000000e+00 : f32
    %622 = vector.broadcast %cst_293 : f32 to vector<2x32xf32>
    %623 = arith.addf %622, %621 : vector<2x32xf32>
    %624 = arith.divf %622, %623 : vector<2x32xf32>
    %625 = arith.mulf %616, %599 : vector<2x32xf32>
    %626 = arith.mulf %610, %618 : vector<2x32xf32>
    %627 = arith.addf %625, %626 : vector<2x32xf32>
    %628 = math.tanh %627 : vector<2x32xf32>
    %629 = arith.mulf %624, %628 : vector<2x32xf32>
    %c0_294 = arith.constant 0 : index
    %c0_295 = arith.constant 0 : index
    %630 = vector.load %arg13[%c0_294, %c0_295] : memref<2x32xf32, #tpu.memory_space<vmem>>, vector<2x32xf32>
    tpu.vector_store %arg13[%c0_294, %c0_295], %627 {strides = array<i32>} : memref<2x32xf32, #tpu.memory_space<vmem>>, vector<2x32xf32>,
    %c0_296 = arith.constant 0 : index
    %c0_297 = arith.constant 0 : index
    %631 = vector.load %arg12[%c0_296, %c0_297] : memref<2x32xf32, #tpu.memory_space<vmem>>, vector<2x32xf32>
    tpu.vector_store %arg12[%c0_296, %c0_297], %629 {strides = array<i32>} : memref<2x32xf32, #tpu.memory_space<vmem>>, vector<2x32xf32>,
    %632 = arith.index_cast %c7_i32_283 : i32 to index
    %c0_298 = arith.constant 0 : index
    %c0_299 = arith.constant 0 : index
    %633 = vector.load %arg11[%632, %c0_298, %c0_299] : memref<8x2x32xf32, #tpu.memory_space<vmem>>, vector<1x2x32xf32>
    %634 = vector.shape_cast %633 : vector<1x2x32xf32> to vector<2x32xf32>
    %635 = vector.shape_cast %629 : vector<2x32xf32> to vector<1x2x32xf32>
    tpu.vector_store %arg11[%632, %c0_298, %c0_299], %635 {strides = array<i32>} : memref<8x2x32xf32, #tpu.memory_space<vmem>>, vector<1x2x32xf32>,
    %c8_i32_300 = arith.constant 8 : i32
    %c0_301 = arith.constant 0 : index
    %c0_302 = arith.constant 0 : index
    %c0_303 = arith.constant 0 : index
    %636 = vector.load %arg11[%c0_301, %c0_302, %c0_303] : memref<8x2x32xf32, #tpu.memory_space<vmem>>, vector<8x2x32xf32>
    %637 = vector.shape_cast %636 : vector<8x2x32xf32> to vector<16x32xf32>
    %c0_304 = arith.constant 0 : index
    %c0_305 = arith.constant 0 : index
    %638 = vector.load %arg7[%c0_304, %c0_305] : memref<32x24xf32, #tpu.memory_space<vmem>>, vector<32x24xf32>
    %cst_306 = arith.constant dense<0.000000e+00> : vector<16x24xf32>
    %639 = tpu.matmul %637, %638, %cst_306 {dimension_numbers = #tpu.dot_dimension_numbers<[1], [0], [0], [1], [0, 0, 1, 1], [], []>} : vector<16x32xf32>, vector<32x24xf32>, vector<16x24xf32> -> vector<16x24xf32>
    %c0_307 = arith.constant 0 : index
    %c0_308 = arith.constant 0 : index
    %640 = vector.load %arg8[%c0_307, %c0_308] : memref<1x24xf32, #tpu.memory_space<vmem>>, vector<1x24xf32>
    %641 = vector.broadcast %640 : vector<1x24xf32> to vector<16x24xf32>
    %642 = arith.addf %639, %641 : vector<16x24xf32>
    %643 = vector.shape_cast %642 : vector<16x24xf32> to vector<8x2x24xf32>
    %c0_309 = arith.constant 0 : index
    %c0_310 = arith.constant 0 : index
    %c0_311 = arith.constant 0 : index
    %644 = vector.load %arg9[%c0_309, %c0_310, %c0_311] : memref<8x2x24xf32, #tpu.memory_space<vmem>>, vector<8x2x24xf32>
    tpu.vector_store %arg9[%c0_309, %c0_310, %c0_311], %643 {strides = array<i32>} : memref<8x2x24xf32, #tpu.memory_space<vmem>>, vector<8x2x24xf32>,
    return
  }
}

</mosaic_0001>

<llo_original>
// kernel: lstm_am_forward.1
$region0: #{lstm_am_forward.1}
  #allocation0 [shape = 'u32[]', space=smem, size = 0x4, offset = 0x4, fixed_abs, tag = 'smem constant byte address 0x4 - core index']
  #allocation1 [shape = 'u32[72,128]{1,0:T(1,128)}', space=vmem, size = 0x9000, scoped, tag = 'internal scratch']
  #allocation2 [shape = 'f32[8,2,128]{2,1,0:T(2,128)}', space=vmem, size = 0x2000, scoped, tag = 'scratch operand']
  #allocation3 [shape = 'f32[8,2,32]{2,1,0:T(2,128)}', space=vmem, size = 0x2000, scoped, tag = 'scratch operand']
  #allocation4 [shape = 'f32[2,32]{1,0:T(2,128)}', space=vmem, size = 0x400, scoped, tag = 'scratch operand']
  #allocation5 [shape = 'f32[2,32]{1,0:T(2,128)}', space=vmem, size = 0x400, scoped, tag = 'scratch operand']
  %s0 = inlined_call_operand.vmem [shape: f32[8,2,16], index: 0, kind: input, shape index: {}]
  %s1 = inlined_call_operand.vmem [shape: f32[16,128], index: 1, kind: input, shape index: {}]
  %s2 = inlined_call_operand.vmem [shape: f32[32,128], index: 2, kind: input, shape index: {}]
  %s3 = inlined_call_operand.vmem [shape: f32[1,128], index: 3, kind: input, shape index: {}]
  %s4 = inlined_call_operand.vmem [shape: f32[32,128], index: 4, kind: input, shape index: {}]
  %s5 = inlined_call_operand.hbm [shape: f32[32,128], index: 5, kind: input, shape index: {}]
  %s6 = inlined_call_operand.vmem [shape: f32[1,128], index: 6, kind: input, shape index: {}]
  %s7 = inlined_call_operand.vmem [shape: f32[32,24], index: 7, kind: input, shape index: {}]
  %s8 = inlined_call_operand.vmem [shape: f32[1,24], index: 8, kind: input, shape index: {}]
  %s9 = inlined_call_operand.vmem [shape: f32[8,2,24], index: 9, kind: output, shape index: {}]
  %s10 = sld [smem:[#allocation0]]
  $region50: #{lstm_am_forward.1} parent=0
    _
  %s12 = ssub.s32 1, %s10
  %s13 = scalar_select 0, %s12, %s10
  $region1: #{lstm_am_forward.1} parent=0
    #allocation6 [shape = 'u8[16384]{0}', space=vmem, size = 0x4000, scoped, tag = 'input window, operand 5, single buffered']
    #allocation7 [shape = 's32[1]{0}', space=sflag, size = 0x4, scoped, tag = 'scoped memory for lstm_am_forward.1']
    %14 = vsyncpa [#allocation7], 0
    // Predicated region
    $region2: #{lstm_am_forward.1} parent=1 // pred_check
      _
    $region3: #{lstm_am_forward.1} parent=1 // pred_check_branch
      %16 = sbr.rel (0) target = $region5
    $region4: #{lstm_am_forward.1} parent=1 // pred_region
      _
    $region5: #{lstm_am_forward.1} parent=1 // pred_fallthru
      _
    // Predicated region
    $region6: #{lstm_am_forward.1} parent=1 // pred_check
      _
    $region7: #{lstm_am_forward.1} parent=1 // pred_check_branch
      %18 = sbr.rel (0) target = $region9
    $region8: #{lstm_am_forward.1} parent=1 // pred_region
      _
    $region9: #{lstm_am_forward.1} parent=1 // pred_fallthru
      _
    // Predicated region
    $region10: #{lstm_am_forward.1} parent=1 // pred_check
      _
    $region11: #{lstm_am_forward.1} parent=1 // pred_check_branch
      %20 = sbr.rel (0) target = $region13
    $region12: #{lstm_am_forward.1} parent=1 // pred_region
      _
    $region13: #{lstm_am_forward.1} parent=1 // pred_fallthru
      _
    // Predicated region
    $region14: #{lstm_am_forward.1} parent=1 // pred_check
      _
    $region15: #{lstm_am_forward.1} parent=1 // pred_check_branch
      %22 = sbr.rel (0) target = $region17
    $region16: #{lstm_am_forward.1} parent=1 // pred_region
      _
    $region17: #{lstm_am_forward.1} parent=1 // pred_fallthru
      _
    // Predicated region
    $region18: #{lstm_am_forward.1} parent=1 // pred_check
      _
    $region19: #{lstm_am_forward.1} parent=1 // pred_check_branch
      %24 = sbr.rel (0) target = $region21
    $region20: #{lstm_am_forward.1} parent=1 // pred_region
      _
    $region21: #{lstm_am_forward.1} parent=1 // pred_fallthru
      _
    // Predicated region
    $region22: #{lstm_am_forward.1} parent=1 // pred_check
      _
    $region23: #{lstm_am_forward.1} parent=1 // pred_check_branch
      %26 = sbr.rel (0) target = $region25
    $region24: #{lstm_am_forward.1} parent=1 // pred_region
      %28 = vsyncadd [#allocation7], 0
      %s29 = sshll.u32 %s5, 4
      %s30 = int_to_ptr.hbm [resolvable:$true] %s29
      %s31 = sshll.u32 [#allocation6], 4
      %s32 = int_to_ptr.vmem [resolvable:$true] %s31
      %37 = dma.hbm_to_vmem [thread:$0]  %s30, 512, %s32, [#allocation7], 128, 128, 8
    $region25: #{lstm_am_forward.1} parent=1 // pred_fallthru
      _
    // Predicated region
    $region26: #{lstm_am_forward.1} parent=1 // pred_check
      _
    $region27: #{lstm_am_forward.1} parent=1 // pred_check_branch
      %39 = sbr.rel (0) target = $region29
    $region28: #{lstm_am_forward.1} parent=1 // pred_region
      _
    $region29: #{lstm_am_forward.1} parent=1 // pred_fallthru
      _
    // Predicated region
    $region30: #{lstm_am_forward.1} parent=1 // pred_check
      _
    $region31: #{lstm_am_forward.1} parent=1 // pred_check_branch
      %41 = sbr.rel (0) target = $region33
    $region32: #{lstm_am_forward.1} parent=1 // pred_region
      _
    $region33: #{lstm_am_forward.1} parent=1 // pred_fallthru
      _
    // Predicated region
    $region34: #{lstm_am_forward.1} parent=1 // pred_check
      _
    $region35: #{lstm_am_forward.1} parent=1 // pred_check_branch
      %43 = sbr.rel (0) target = $region37
    $region36: #{lstm_am_forward.1} parent=1 // pred_region
      _
    $region37: #{lstm_am_forward.1} parent=1 // pred_fallthru
      _
    // Predicated region
    $region38: #{lstm_am_forward.1} parent=1 // pred_check
      _
    $region39: #{lstm_am_forward.1} parent=1 // pred_check_branch
      %45 = sbr.rel (0) target = $region41
    $region40: #{lstm_am_forward.1} parent=1 // pred_region
      %47 = dma.done [#allocation7], 512
    $region41: #{lstm_am_forward.1} parent=1 // pred_fallthru
      _
    %v48 = vld [vmem:[%s0] sm:$0x3]
    %v49 = vld [vmem:[%s0 + $0x2] sm:$0x3]
    %v50 = vld [vmem:[%s0 + $0x4] sm:$0x3]
    %v51 = vld [vmem:[%s0 + $0x6] sm:$0x3]
    %v52 = vld [vmem:[%s0 + $0x8] sm:$0x3]
    %v53 = vld [vmem:[%s0 + $0xa] sm:$0x3]
    %v54 = vld [vmem:[%s0 + $0xc] sm:$0x3]
    %v55 = vld [vmem:[%s0 + $0xe] sm:$0x3]
    %v56 = vld [vmem:[%s1] sm:$0xff]
    %v57 = vld [vmem:[%s1 + $0x8] sm:$0xff]
    %v58 = vld [vmem:[%s3] sm:$0x1]
    %v60 = vperm.slane %v58, 0
    %70 = vst [vmem:[#allocation1] ss:$4 sm:$0xff] %v48
    %s71 = scalar_lea.vmem [#allocation1], 1
    %72 = vst [vmem:[%s71] ss:$4 sm:$0xff] %v49
    %s73 = scalar_lea.vmem [#allocation1], 2
    %74 = vst [vmem:[%s73] ss:$4 sm:$0xff] %v50
    %s75 = scalar_lea.vmem [#allocation1], 3
    %76 = vst [vmem:[%s75] ss:$4 sm:$0xff] %v51
    %s77 = scalar_lea.vmem [#allocation1], 32
    %78 = vst [vmem:[%s77] ss:$4 sm:$0xff] %v52
    %s79 = scalar_lea.vmem [#allocation1], 33
    %80 = vst [vmem:[%s79] ss:$4 sm:$0xff] %v53
    %s81 = scalar_lea.vmem [#allocation1], 34
    %82 = vst [vmem:[%s81] ss:$4 sm:$0xff] %v54
    %s83 = scalar_lea.vmem [#allocation1], 35
    %84 = vst [vmem:[%s83] ss:$4 sm:$0xff] %v55
    %v85 = vld.sshfl [vmem:[#allocation1] sm:$0xff pattern:$0x73625140]
    %v86 = vld.sshfl [vmem:[#allocation1 + $0x20] sm:$0xff pattern:$0x73625140]
    %vm87 = vcmask 130048
    %v88 = vsel %vm87, %v85, 0
    %v90 = vsel %vm87, %v86, 0
    %92 = vmatpush.msra.mxu0 0.0
    %93 = vmatpush.msra.mxu0 0.0
    %94 = vmatpush.msra.mxu0 0.0
    %95 = vmatpush.msra.mxu0 0.0
    %96 = vmatpush.msra.mxu0 0.0
    %97 = vmatpush.msra.mxu0 0.0
    %98 = vmatpush.msra.mxu0 0.0
    %99 = vmatpush.msra.mxu0 0.0
    %100 = vmatpush.msra.mxu0 0.0
    %101 = vmatpush.msra.mxu0 0.0
    %102 = vmatpush.msra.mxu0 0.0
    %103 = vmatpush.msra.mxu0 0.0
    %104 = vmatpush.msra.mxu0 0.0
    %105 = vmatpush.msra.mxu0 0.0
    %106 = vmatpush.msra.mxu0 %v57
    %107 = vmatpush.msra.mxu0 %v56
    %108 = vmatmul.f32.gmra.mxu0 %v88
    %v109 = vpop.f32.mrf.mxu0
    %v110 = vadd.f32 %v60, %v109
    %111 = vmatmul.f32.gmra.mxu0 %v90
    %v112 = vpop.f32.mrf.mxu0
    %v113 = vadd.f32 %v60, %v112
    %114 = vdwg.mxu0
    %v117 = vrot.slane %v110, 2
    %v118 = vrot.slane %v110, 4
    %v119 = vrot.slane %v110, 6
    %v120 = vrot.slane %v113, 2
    %v121 = vrot.slane %v113, 4
    %v122 = vrot.slane %v113, 6
    %129 = vst [vmem:[#allocation2] sm:$0x3] %v110
    %130 = vst [vmem:[#allocation2 + $0x2] sm:$0x3] %v117
    %131 = vst [vmem:[#allocation2 + $0x4] sm:$0x3] %v118
    %132 = vst [vmem:[#allocation2 + $0x6] sm:$0x3] %v119
    %133 = vst [vmem:[#allocation2 + $0x8] sm:$0x3] %v113
    %134 = vst [vmem:[#allocation2 + $0xa] sm:$0x3] %v120
    %135 = vst [vmem:[#allocation2 + $0xc] sm:$0x3] %v121
    %136 = vst [vmem:[#allocation2 + $0xe] sm:$0x3] %v122
    %vm137 = vcmask 254976
    %138 = vst.msk [vmem:[#allocation4] sm:$0x3] %vm137, 0.0
    %139 = vst.msk [vmem:[#allocation5] sm:$0x3] %vm137, 0.0
    %v140 = vld [vmem:[%s2] sm:$0xff]
    %v141 = vld [vmem:[%s2 + $0x8] sm:$0xff]
    %v142 = vld [vmem:[%s2 + $0x10] sm:$0xff]
    %v143 = vld [vmem:[%s2 + $0x18] sm:$0xff]
    %v144 = vld [vmem:[#allocation4] sm:$0x3]
    %v145 = vld [vmem:[#allocation5] sm:$0x3]
    %v146 = vld [vmem:[#allocation2] sm:$0x3]
    %vm147 = vcmask 261120
    %v149 = vsel %vm147, %v144, 0
    %151 = vmatpush.msra.mxu0 0.0
    %152 = vmatpush.msra.mxu0 0.0
    %153 = vmatpush.msra.mxu0 0.0
    %154 = vmatpush.msra.mxu0 0.0
    %155 = vmatpush.msra.mxu0 0.0
    %156 = vmatpush.msra.mxu0 0.0
    %157 = vmatpush.msra.mxu0 0.0
    %158 = vmatpush.msra.mxu0 0.0
    %159 = vmatpush.msra.mxu0 0.0
    %160 = vmatpush.msra.mxu0 0.0
    %161 = vmatpush.msra.mxu0 0.0
    %162 = vmatpush.msra.mxu0 0.0
    %163 = vmatpush.msra.mxu0 %v143
    %164 = vmatpush.msra.mxu0 %v142
    %165 = vmatpush.msra.mxu0 %v141
    %166 = vmatpush.msra.mxu0 %v140
    %167 = vmatmul.f32.gmra.mxu0 %v149
    %v168 = vpop.f32.mrf.mxu0
    %v169 = vadd.f32 0.0, %v168
    %170 = vdwg.mxu0
    %v171 = vadd.f32 %v146, %v169
    %v172 = vxor.u32 %v171, 2147483648
    %v173 = vmul.f32 %v172, 1.442695
    %v174 = vpow.pop %v173
    %v175 = vadd.f32 %v174, 1.0
    %v176 = vrcp.pop %v175
    %v177 = vmul.f32 %v175, %v176
    %v178 = vsub.f32 1.0, %v177
    %v179 = vmul.f32 %v176, %v178
    %v180 = vadd.f32 %v176, %v179
    %vm181 = vweird.f32 %v175
    %vm182 = vweird.f32 %v176
    %vm183 = vmor %vm181, %vm182
    %v184 = vsel %vm183, %v176, %v180
    %v185 = vand.u32 2147483647, %v175
    %vm186 = vcmp.eq.f32.partialorder %v185, 8.507059e+37
    %v187 = vand.u32 %v175, 2147483648
    %v188 = vor.u32 1.1754944e-38, %v187
    %v189 = vsel %vm186, %v188, %v184
    %v190 = vmul.f32 1.0, %v189
    %v191 = vtanh.pop %v171
    %193 = vrot.lane.b32.xlu0 %v145, 32
    %v194 = vpop.permute.xlu0 %193
    %v196 = vmul.f32 %v190, %v194
    %198 = vrot.lane.b32.xlu0 %v191, 64
    %v199 = vpop.permute.xlu0 %198
    %v201 = vmul.f32 %v190, %v199
    %203 = vrot.lane.b32.xlu0 %v201, 32
    %v204 = vpop.permute.xlu0 %203
    %v206 = vadd.f32 %v196, %v204
    %v207 = vtanh.pop %v206
    %209 = vrot.lane.b32.xlu0 %v207, 64
    %v210 = vpop.permute.xlu0 %209
    %v212 = vmul.f32 %v190, %v210
    %214 = vrot.lane.b32.xlu0 %v206, 96
    %v215 = vpop.permute.xlu0 %214
    %217 = vst.msk [vmem:[#allocation5] sm:$0x3] %vm137, %v215
    %219 = vrot.lane.b32.xlu0 %v212, 32
    %v220 = vpop.permute.xlu0 %219
    %222 = vst.msk [vmem:[#allocation4] sm:$0x3] %vm137, %v220
    %223 = vst.msk [vmem:[#allocation3] sm:$0x3] %vm137, %v220
    %v224 = vld [vmem:[#allocation4] sm:$0x3]
    %v225 = vld [vmem:[#allocation5] sm:$0x3]
    %s226 = scalar_lea.vmem [#allocation2], 2
    %v227 = vld [vmem:[%s226] sm:$0x3]
    %v229 = vsel %vm147, %v224, 0
    %231 = vmatpush.msra.mxu0 0.0
    %232 = vmatpush.msra.mxu0 0.0
    %233 = vmatpush.msra.mxu0 0.0
    %234 = vmatpush.msra.mxu0 0.0
    %235 = vmatpush.msra.mxu0 0.0
    %236 = vmatpush.msra.mxu0 0.0
    %237 = vmatpush.msra.mxu0 0.0
    %238 = vmatpush.msra.mxu0 0.0
    %239 = vmatpush.msra.mxu0 0.0
    %240 = vmatpush.msra.mxu0 0.0
    %241 = vmatpush.msra.mxu0 0.0
    %242 = vmatpush.msra.mxu0 0.0
    %243 = vmatpush.msra.mxu0 %v143
    %244 = vmatpush.msra.mxu0 %v142
    %245 = vmatpush.msra.mxu0 %v141
    %246 = vmatpush.msra.mxu0 %v140
    %247 = vmatmul.f32.gmra.mxu0 %v229
    %v248 = vpop.f32.mrf.mxu0
    %v249 = vadd.f32 0.0, %v248
    %250 = vdwg.mxu0
    %v251 = vadd.f32 %v227, %v249
    %v252 = vxor.u32 %v251, 2147483648
    %v253 = vmul.f32 %v252, 1.442695
    %v254 = vpow.pop %v253
    %v255 = vadd.f32 %v254, 1.0
    %v256 = vrcp.pop %v255
    %v257 = vmul.f32 %v255, %v256
    %v258 = vsub.f32 1.0, %v257
    %v259 = vmul.f32 %v256, %v258
    %v260 = vadd.f32 %v256, %v259
    %vm261 = vweird.f32 %v255
    %vm262 = vweird.f32 %v256
    %vm263 = vmor %vm261, %vm262
    %v264 = vsel %vm263, %v256, %v260
    %v265 = vand.u32 2147483647, %v255
    %vm266 = vcmp.eq.f32.partialorder %v265, 8.507059e+37
    %v267 = vand.u32 %v255, 2147483648
    %v268 = vor.u32 1.1754944e-38, %v267
    %v269 = vsel %vm266, %v268, %v264
    %v270 = vmul.f32 1.0, %v269
    %v271 = vtanh.pop %v251
    %273 = vrot.lane.b32.xlu0 %v225, 32
    %v274 = vpop.permute.xlu0 %273
    %v276 = vmul.f32 %v270, %v274
    %278 = vrot.lane.b32.xlu0 %v271, 64
    %v279 = vpop.permute.xlu0 %278
    %v281 = vmul.f32 %v270, %v279
    %283 = vrot.lane.b32.xlu0 %v281, 32
    %v284 = vpop.permute.xlu0 %283
    %v286 = vadd.f32 %v276, %v284
    %v287 = vtanh.pop %v286
    %289 = vrot.lane.b32.xlu0 %v287, 64
    %v290 = vpop.permute.xlu0 %289
    %v292 = vmul.f32 %v270, %v290
    %294 = vrot.lane.b32.xlu0 %v286, 96
    %v295 = vpop.permute.xlu0 %294
    %297 = vst.msk [vmem:[#allocation5] sm:$0x3] %vm137, %v295
    %299 = vrot.lane.b32.xlu0 %v292, 32
    %v300 = vpop.permute.xlu0 %299
    %302 = vst.msk [vmem:[#allocation4] sm:$0x3] %vm137, %v300
    %s303 = scalar_lea.vmem [#allocation3], 2
    %304 = vst.msk [vmem:[%s303] sm:$0x3] %vm137, %v300
    %v305 = vld [vmem:[#allocation4] sm:$0x3]
    %v306 = vld [vmem:[#allocation5] sm:$0x3]
    %s307 = scalar_lea.vmem [#allocation2], 4
    %v308 = vld [vmem:[%s307] sm:$0x3]
    %v310 = vsel %vm147, %v305, 0
    %312 = vmatpush.msra.mxu0 0.0
    %313 = vmatpush.msra.mxu0 0.0
    %314 = vmatpush.msra.mxu0 0.0
    %315 = vmatpush.msra.mxu0 0.0
    %316 = vmatpush.msra.mxu0 0.0
    %317 = vmatpush.msra.mxu0 0.0
    %318 = vmatpush.msra.mxu0 0.0
    %319 = vmatpush.msra.mxu0 0.0
    %320 = vmatpush.msra.mxu0 0.0
    %321 = vmatpush.msra.mxu0 0.0
    %322 = vmatpush.msra.mxu0 0.0
    %323 = vmatpush.msra.mxu0 0.0
    %324 = vmatpush.msra.mxu0 %v143
    %325 = vmatpush.msra.mxu0 %v142
    %326 = vmatpush.msra.mxu0 %v141
    %327 = vmatpush.msra.mxu0 %v140
    %328 = vmatmul.f32.gmra.mxu0 %v310
    %v329 = vpop.f32.mrf.mxu0
    %v330 = vadd.f32 0.0, %v329
    %331 = vdwg.mxu0
    %v332 = vadd.f32 %v308, %v330
    %v333 = vxor.u32 %v332, 2147483648
    %v334 = vmul.f32 %v333, 1.442695
    %v335 = vpow.pop %v334
    %v336 = vadd.f32 %v335, 1.0
    %v337 = vrcp.pop %v336
    %v338 = vmul.f32 %v336, %v337
    %v339 = vsub.f32 1.0, %v338
    %v340 = vmul.f32 %v337, %v339
    %v341 = vadd.f32 %v337, %v340
    %vm342 = vweird.f32 %v336
    %vm343 = vweird.f32 %v337
    %vm344 = vmor %vm342, %vm343
    %v345 = vsel %vm344, %v337, %v341
    %v346 = vand.u32 2147483647, %v336
    %vm347 = vcmp.eq.f32.partialorder %v346, 8.507059e+37
    %v348 = vand.u32 %v336, 2147483648
    %v349 = vor.u32 1.1754944e-38, %v348
    %v350 = vsel %vm347, %v349, %v345
    %v351 = vmul.f32 1.0, %v350
    %v352 = vtanh.pop %v332
    %354 = vrot.lane.b32.xlu0 %v306, 32
    %v355 = vpop.permute.xlu0 %354
    %v357 = vmul.f32 %v351, %v355
    %359 = vrot.lane.b32.xlu0 %v352, 64
    %v360 = vpop.permute.xlu0 %359
    %v362 = vmul.f32 %v351, %v360
    %364 = vrot.lane.b32.xlu0 %v362, 32
    %v365 = vpop.permute.xlu0 %364
    %v367 = vadd.f32 %v357, %v365
    %v368 = vtanh.pop %v367
    %370 = vrot.lane.b32.xlu0 %v368, 64
    %v371 = vpop.permute.xlu0 %370
    %v373 = vmul.f32 %v351, %v371
    %375 = vrot.lane.b32.xlu0 %v367, 96
    %v376 = vpop.permute.xlu0 %375
    %378 = vst.msk [vmem:[#allocation5] sm:$0x3] %vm137, %v376
    %380 = vrot.lane.b32.xlu0 %v373, 32
    %v381 = vpop.permute.xlu0 %380
    %383 = vst.msk [vmem:[#allocation4] sm:$0x3] %vm137, %v381
    %s384 = scalar_lea.vmem [#allocation3], 4
    %385 = vst.msk [vmem:[%s384] sm:$0x3] %vm137, %v381
    %v386 = vld [vmem:[#allocation4] sm:$0x3]
    %v387 = vld [vmem:[#allocation5] sm:$0x3]
    %s388 = scalar_lea.vmem [#allocation2], 6
    %v389 = vld [vmem:[%s388] sm:$0x3]
    %v391 = vsel %vm147, %v386, 0
    %393 = vmatpush.msra.mxu0 0.0
    %394 = vmatpush.msra.mxu0 0.0
    %395 = vmatpush.msra.mxu0 0.0
    %396 = vmatpush.msra.mxu0 0.0
    %397 = vmatpush.msra.mxu0 0.0
    %398 = vmatpush.msra.mxu0 0.0
    %399 = vmatpush.msra.mxu0 0.0
    %400 = vmatpush.msra.mxu0 0.0
    %401 = vmatpush.msra.mxu0 0.0
    %402 = vmatpush.msra.mxu0 0.0
    %403 = vmatpush.msra.mxu0 0.0
    %404 = vmatpush.msra.mxu0 0.0
    %405 = vmatpush.msra.mxu0 %v143
    %406 = vmatpush.msra.mxu0 %v142
    %407 = vmatpush.msra.mxu0 %v141
    %408 = vmatpush.msra.mxu0 %v140
    %409 = vmatmul.f32.gmra.mxu0 %v391
    %v410 = vpop.f32.mrf.mxu0
    %v411 = vadd.f32 0.0, %v410
    %412 = vdwg.mxu0
    %v413 = vadd.f32 %v389, %v411
    %v414 = vxor.u32 %v413, 2147483648
    %v415 = vmul.f32 %v414, 1.442695
    %v416 = vpow.pop %v415
    %v417 = vadd.f32 %v416, 1.0
    %v418 = vrcp.pop %v417
    %v419 = vmul.f32 %v417, %v418
    %v420 = vsub.f32 1.0, %v419
    %v421 = vmul.f32 %v418, %v420
    %v422 = vadd.f32 %v418, %v421
    %vm423 = vweird.f32 %v417
    %vm424 = vweird.f32 %v418
    %vm425 = vmor %vm423, %vm424
    %v426 = vsel %vm425, %v418, %v422
    %v427 = vand.u32 2147483647, %v417
    %vm428 = vcmp.eq.f32.partialorder %v427, 8.507059e+37
    %v429 = vand.u32 %v417, 2147483648
    %v430 = vor.u32 1.1754944e-38, %v429
    %v431 = vsel %vm428, %v430, %v426
    %v432 = vmul.f32 1.0, %v431
    %v433 = vtanh.pop %v413
    %435 = vrot.lane.b32.xlu0 %v387, 32
    %v436 = vpop.permute.xlu0 %435
    %v438 = vmul.f32 %v432, %v436
    %440 = vrot.lane.b32.xlu0 %v433, 64
    %v441 = vpop.permute.xlu0 %440
    %v443 = vmul.f32 %v432, %v441
    %445 = vrot.lane.b32.xlu0 %v443, 32
    %v446 = vpop.permute.xlu0 %445
    %v448 = vadd.f32 %v438, %v446
    %v449 = vtanh.pop %v448
    %451 = vrot.lane.b32.xlu0 %v449, 64
    %v452 = vpop.permute.xlu0 %451
    %v454 = vmul.f32 %v432, %v452
    %456 = vrot.lane.b32.xlu0 %v448, 96
    %v457 = vpop.permute.xlu0 %456
    %459 = vst.msk [vmem:[#allocation5] sm:$0x3] %vm137, %v457
    %461 = vrot.lane.b32.xlu0 %v454, 32
    %v462 = vpop.permute.xlu0 %461
    %464 = vst.msk [vmem:[#allocation4] sm:$0x3] %vm137, %v462
    %s465 = scalar_lea.vmem [#allocation3], 6
    %466 = vst.msk [vmem:[%s465] sm:$0x3] %vm137, %v462
    %v467 = vld [vmem:[#allocation4] sm:$0x3]
    %v468 = vld [vmem:[#allocation5] sm:$0x3]
    %s469 = scalar_lea.vmem [#allocation2], 8
    %v470 = vld [vmem:[%s469] sm:$0x3]
    %v472 = vsel %vm147, %v467, 0
    %474 = vmatpush.msra.mxu0 0.0
    %475 = vmatpush.msra.mxu0 0.0
    %476 = vmatpush.msra.mxu0 0.0
    %477 = vmatpush.msra.mxu0 0.0
    %478 = vmatpush.msra.mxu0 0.0
    %479 = vmatpush.msra.mxu0 0.0
    %480 = vmatpush.msra.mxu0 0.0
    %481 = vmatpush.msra.mxu0 0.0
    %482 = vmatpush.msra.mxu0 0.0
    %483 = vmatpush.msra.mxu0 0.0
    %484 = vmatpush.msra.mxu0 0.0
    %485 = vmatpush.msra.mxu0 0.0
    %486 = vmatpush.msra.mxu0 %v143
    %487 = vmatpush.msra.mxu0 %v142
    %488 = vmatpush.msra.mxu0 %v141
    %489 = vmatpush.msra.mxu0 %v140
    %490 = vmatmul.f32.gmra.mxu0 %v472
    %v491 = vpop.f32.mrf.mxu0
    %v492 = vadd.f32 0.0, %v491
    %493 = vdwg.mxu0
    %v494 = vadd.f32 %v470, %v492
    %v495 = vxor.u32 %v494, 2147483648
    %v496 = vmul.f32 %v495, 1.442695
    %v497 = vpow.pop %v496
    %v498 = vadd.f32 %v497, 1.0
    %v499 = vrcp.pop %v498
    %v500 = vmul.f32 %v498, %v499
    %v501 = vsub.f32 1.0, %v500
    %v502 = vmul.f32 %v499, %v501
    %v503 = vadd.f32 %v499, %v502
    %vm504 = vweird.f32 %v498
    %vm505 = vweird.f32 %v499
    %vm506 = vmor %vm504, %vm505
    %v507 = vsel %vm506, %v499, %v503
    %v508 = vand.u32 2147483647, %v498
    %vm509 = vcmp.eq.f32.partialorder %v508, 8.507059e+37
    %v510 = vand.u32 %v498, 2147483648
    %v511 = vor.u32 1.1754944e-38, %v510
    %v512 = vsel %vm509, %v511, %v507
    %v513 = vmul.f32 1.0, %v512
    %v514 = vtanh.pop %v494
    %516 = vrot.lane.b32.xlu0 %v468, 32
    %v517 = vpop.permute.xlu0 %516
    %v519 = vmul.f32 %v513, %v517
    %521 = vrot.lane.b32.xlu0 %v514, 64
    %v522 = vpop.permute.xlu0 %521
    %v524 = vmul.f32 %v513, %v522
    %526 = vrot.lane.b32.xlu0 %v524, 32
    %v527 = vpop.permute.xlu0 %526
    %v529 = vadd.f32 %v519, %v527
    %v530 = vtanh.pop %v529
    %532 = vrot.lane.b32.xlu0 %v530, 64
    %v533 = vpop.permute.xlu0 %532
    %v535 = vmul.f32 %v513, %v533
    %537 = vrot.lane.b32.xlu0 %v529, 96
    %v538 = vpop.permute.xlu0 %537
    %540 = vst.msk [vmem:[#allocation5] sm:$0x3] %vm137, %v538
    %542 = vrot.lane.b32.xlu0 %v535, 32
    %v543 = vpop.permute.xlu0 %542
    %545 = vst.msk [vmem:[#allocation4] sm:$0x3] %vm137, %v543
    %s546 = scalar_lea.vmem [#allocation3], 8
    %547 = vst.msk [vmem:[%s546] sm:$0x3] %vm137, %v543
    %v548 = vld [vmem:[#allocation4] sm:$0x3]
    %v549 = vld [vmem:[#allocation5] sm:$0x3]
    %s550 = scalar_lea.vmem [#allocation2], 10
    %v551 = vld [vmem:[%s550] sm:$0x3]
    %v553 = vsel %vm147, %v548, 0
    %555 = vmatpush.msra.mxu0 0.0
    %556 = vmatpush.msra.mxu0 0.0
    %557 = vmatpush.msra.mxu0 0.0
    %558 = vmatpush.msra.mxu0 0.0
    %559 = vmatpush.msra.mxu0 0.0
    %560 = vmatpush.msra.mxu0 0.0
    %561 = vmatpush.msra.mxu0 0.0
    %562 = vmatpush.msra.mxu0 0.0
    %563 = vmatpush.msra.mxu0 0.0
    %564 = vmatpush.msra.mxu0 0.0
    %565 = vmatpush.msra.mxu0 0.0
    %566 = vmatpush.msra.mxu0 0.0
    %567 = vmatpush.msra.mxu0 %v143
    %568 = vmatpush.msra.mxu0 %v142
    %569 = vmatpush.msra.mxu0 %v141
    %570 = vmatpush.msra.mxu0 %v140
    %571 = vmatmul.f32.gmra.mxu0 %v553
    %v572 = vpop.f32.mrf.mxu0
    %v573 = vadd.f32 0.0, %v572
    %574 = vdwg.mxu0
    %v575 = vadd.f32 %v551, %v573
    %v576 = vxor.u32 %v575, 2147483648
    %v577 = vmul.f32 %v576, 1.442695
    %v578 = vpow.pop %v577
    %v579 = vadd.f32 %v578, 1.0
    %v580 = vrcp.pop %v579
    %v581 = vmul.f32 %v579, %v580
    %v582 = vsub.f32 1.0, %v581
    %v583 = vmul.f32 %v580, %v582
    %v584 = vadd.f32 %v580, %v583
    %vm585 = vweird.f32 %v579
    %vm586 = vweird.f32 %v580
    %vm587 = vmor %vm585, %vm586
    %v588 = vsel %vm587, %v580, %v584
    %v589 = vand.u32 2147483647, %v579
    %vm590 = vcmp.eq.f32.partialorder %v589, 8.507059e+37
    %v591 = vand.u32 %v579, 2147483648
    %v592 = vor.u32 1.1754944e-38, %v591
    %v593 = vsel %vm590, %v592, %v588
    %v594 = vmul.f32 1.0, %v593
    %v595 = vtanh.pop %v575
    %597 = vrot.lane.b32.xlu0 %v549, 32
    %v598 = vpop.permute.xlu0 %597
    %v600 = vmul.f32 %v594, %v598
    %602 = vrot.lane.b32.xlu0 %v595, 64
    %v603 = vpop.permute.xlu0 %602
    %v605 = vmul.f32 %v594, %v603
    %607 = vrot.lane.b32.xlu0 %v605, 32
    %v608 = vpop.permute.xlu0 %607
    %v610 = vadd.f32 %v600, %v608
    %v611 = vtanh.pop %v610
    %613 = vrot.lane.b32.xlu0 %v611, 64
    %v614 = vpop.permute.xlu0 %613
    %v616 = vmul.f32 %v594, %v614
    %618 = vrot.lane.b32.xlu0 %v610, 96
    %v619 = vpop.permute.xlu0 %618
    %621 = vst.msk [vmem:[#allocation5] sm:$0x3] %vm137, %v619
    %623 = vrot.lane.b32.xlu0 %v616, 32
    %v624 = vpop.permute.xlu0 %623
    %626 = vst.msk [vmem:[#allocation4] sm:$0x3] %vm137, %v624
    %s627 = scalar_lea.vmem [#allocation3], 10
    %628 = vst.msk [vmem:[%s627] sm:$0x3] %vm137, %v624
    %v629 = vld [vmem:[#allocation4] sm:$0x3]
    %v630 = vld [vmem:[#allocation5] sm:$0x3]
    %s631 = scalar_lea.vmem [#allocation2], 12
    %v632 = vld [vmem:[%s631] sm:$0x3]
    %v634 = vsel %vm147, %v629, 0
    %636 = vmatpush.msra.mxu0 0.0
    %637 = vmatpush.msra.mxu0 0.0
    %638 = vmatpush.msra.mxu0 0.0
    %639 = vmatpush.msra.mxu0 0.0
    %640 = vmatpush.msra.mxu0 0.0
    %641 = vmatpush.msra.mxu0 0.0
    %642 = vmatpush.msra.mxu0 0.0
    %643 = vmatpush.msra.mxu0 0.0
    %644 = vmatpush.msra.mxu0 0.0
    %645 = vmatpush.msra.mxu0 0.0
    %646 = vmatpush.msra.mxu0 0.0
    %647 = vmatpush.msra.mxu0 0.0
    %648 = vmatpush.msra.mxu0 %v143
    %649 = vmatpush.msra.mxu0 %v142
    %650 = vmatpush.msra.mxu0 %v141
    %651 = vmatpush.msra.mxu0 %v140
    %652 = vmatmul.f32.gmra.mxu0 %v634
    %v653 = vpop.f32.mrf.mxu0
    %v654 = vadd.f32 0.0, %v653
    %655 = vdwg.mxu0
    %v656 = vadd.f32 %v632, %v654
    %v657 = vxor.u32 %v656, 2147483648
    %v658 = vmul.f32 %v657, 1.442695
    %v659 = vpow.pop %v658
    %v660 = vadd.f32 %v659, 1.0
    %v661 = vrcp.pop %v660
    %v662 = vmul.f32 %v660, %v661
    %v663 = vsub.f32 1.0, %v662
    %v664 = vmul.f32 %v661, %v663
    %v665 = vadd.f32 %v661, %v664
    %vm666 = vweird.f32 %v660
    %vm667 = vweird.f32 %v661
    %vm668 = vmor %vm666, %vm667
    %v669 = vsel %vm668, %v661, %v665
    %v670 = vand.u32 2147483647, %v660
    %vm671 = vcmp.eq.f32.partialorder %v670, 8.507059e+37
    %v672 = vand.u32 %v660, 2147483648
    %v673 = vor.u32 1.1754944e-38, %v672
    %v674 = vsel %vm671, %v673, %v669
    %v675 = vmul.f32 1.0, %v674
    %v676 = vtanh.pop %v656
    %678 = vrot.lane.b32.xlu0 %v630, 32
    %v679 = vpop.permute.xlu0 %678
    %v681 = vmul.f32 %v675, %v679
    %683 = vrot.lane.b32.xlu0 %v676, 64
    %v684 = vpop.permute.xlu0 %683
    %v686 = vmul.f32 %v675, %v684
    %688 = vrot.lane.b32.xlu0 %v686, 32
    %v689 = vpop.permute.xlu0 %688
    %v691 = vadd.f32 %v681, %v689
    %v692 = vtanh.pop %v691
    %694 = vrot.lane.b32.xlu0 %v692, 64
    %v695 = vpop.permute.xlu0 %694
    %v697 = vmul.f32 %v675, %v695
    %699 = vrot.lane.b32.xlu0 %v691, 96
    %v700 = vpop.permute.xlu0 %699
    %702 = vst.msk [vmem:[#allocation5] sm:$0x3] %vm137, %v700
    %704 = vrot.lane.b32.xlu0 %v697, 32
    %v705 = vpop.permute.xlu0 %704
    %707 = vst.msk [vmem:[#allocation4] sm:$0x3] %vm137, %v705
    %s708 = scalar_lea.vmem [#allocation3], 12
    %709 = vst.msk [vmem:[%s708] sm:$0x3] %vm137, %v705
    %v710 = vld [vmem:[#allocation4] sm:$0x3]
    %v711 = vld [vmem:[#allocation5] sm:$0x3]
    %s712 = scalar_lea.vmem [#allocation2], 14
    %v713 = vld [vmem:[%s712] sm:$0x3]
    %v715 = vsel %vm147, %v710, 0
    %717 = vmatpush.msra.mxu0 0.0
    %718 = vmatpush.msra.mxu0 0.0
    %719 = vmatpush.msra.mxu0 0.0
    %720 = vmatpush.msra.mxu0 0.0
    %721 = vmatpush.msra.mxu0 0.0
    %722 = vmatpush.msra.mxu0 0.0
    %723 = vmatpush.msra.mxu0 0.0
    %724 = vmatpush.msra.mxu0 0.0
    %725 = vmatpush.msra.mxu0 0.0
    %726 = vmatpush.msra.mxu0 0.0
    %727 = vmatpush.msra.mxu0 0.0
    %728 = vmatpush.msra.mxu0 0.0
    %729 = vmatpush.msra.mxu0 %v143
    %730 = vmatpush.msra.mxu0 %v142
    %731 = vmatpush.msra.mxu0 %v141
    %732 = vmatpush.msra.mxu0 %v140
    %733 = vmatmul.f32.gmra.mxu0 %v715
    %v734 = vpop.f32.mrf.mxu0
    %v735 = vadd.f32 0.0, %v734
    %736 = vdwg.mxu0
    %v737 = vadd.f32 %v713, %v735
    %v738 = vxor.u32 %v737, 2147483648
    %v739 = vmul.f32 %v738, 1.442695
    %v740 = vpow.pop %v739
    %v741 = vadd.f32 %v740, 1.0
    %v742 = vrcp.pop %v741
    %v743 = vmul.f32 %v741, %v742
    %v744 = vsub.f32 1.0, %v743
    %v745 = vmul.f32 %v742, %v744
    %v746 = vadd.f32 %v742, %v745
    %vm747 = vweird.f32 %v741
    %vm748 = vweird.f32 %v742
    %vm749 = vmor %vm747, %vm748
    %v750 = vsel %vm749, %v742, %v746
    %v751 = vand.u32 2147483647, %v741
    %vm752 = vcmp.eq.f32.partialorder %v751, 8.507059e+37
    %v753 = vand.u32 %v741, 2147483648
    %v754 = vor.u32 1.1754944e-38, %v753
    %v755 = vsel %vm752, %v754, %v750
    %v756 = vmul.f32 1.0, %v755
    %v757 = vtanh.pop %v737
    %759 = vrot.lane.b32.xlu0 %v711, 32
    %v760 = vpop.permute.xlu0 %759
    %v762 = vmul.f32 %v756, %v760
    %764 = vrot.lane.b32.xlu0 %v757, 64
    %v765 = vpop.permute.xlu0 %764
    %v767 = vmul.f32 %v756, %v765
    %769 = vrot.lane.b32.xlu0 %v767, 32
    %v770 = vpop.permute.xlu0 %769
    %v772 = vadd.f32 %v762, %v770
    %v773 = vtanh.pop %v772
    %775 = vrot.lane.b32.xlu0 %v773, 64
    %v776 = vpop.permute.xlu0 %775
    %v778 = vmul.f32 %v756, %v776
    %780 = vrot.lane.b32.xlu0 %v772, 96
    %v781 = vpop.permute.xlu0 %780
    %783 = vst.msk [vmem:[#allocation5] sm:$0x3] %vm137, %v781
    %785 = vrot.lane.b32.xlu0 %v778, 32
    %v786 = vpop.permute.xlu0 %785
    %788 = vst.msk [vmem:[#allocation4] sm:$0x3] %vm137, %v786
    %s789 = scalar_lea.vmem [#allocation3], 14
    %790 = vst.msk [vmem:[%s789] sm:$0x3] %vm137, %v786
    %v791 = vld [vmem:[#allocation3] sm:$0x3]
    %v792 = vld [vmem:[#allocation3 + $0x2] sm:$0x3]
    %v793 = vld [vmem:[#allocation3 + $0x4] sm:$0x3]
    %v794 = vld [vmem:[#allocation3 + $0x6] sm:$0x3]
    %v795 = vld [vmem:[#allocation3 + $0x8] sm:$0x3]
    %v796 = vld [vmem:[#allocation3 + $0xa] sm:$0x3]
    %v797 = vld [vmem:[#allocation3 + $0xc] sm:$0x3]
    %v798 = vld [vmem:[#allocation3 + $0xe] sm:$0x3]
    %v799 = vld [vmem:[%s4] sm:$0xff]
    %v800 = vld [vmem:[%s4 + $0x8] sm:$0xff]
    %v801 = vld [vmem:[%s4 + $0x10] sm:$0xff]
    %v802 = vld [vmem:[%s4 + $0x18] sm:$0xff]
    %v803 = vld [vmem:[%s6] sm:$0x1]
    %v805 = vperm.slane %v803, 0
    %815 = vst [vmem:[#allocation1] ss:$4 sm:$0xff] %v791
    %s816 = scalar_lea.vmem [#allocation1], 1
    %817 = vst [vmem:[%s816] ss:$4 sm:$0xff] %v792
    %s818 = scalar_lea.vmem [#allocation1], 2
    %819 = vst [vmem:[%s818] ss:$4 sm:$0xff] %v793
    %s820 = scalar_lea.vmem [#allocation1], 3
    %821 = vst [vmem:[%s820] ss:$4 sm:$0xff] %v794
    %s822 = scalar_lea.vmem [#allocation1], 32
    %823 = vst [vmem:[%s822] ss:$4 sm:$0xff] %v795
    %s824 = scalar_lea.vmem [#allocation1], 33
    %825 = vst [vmem:[%s824] ss:$4 sm:$0xff] %v796
    %s826 = scalar_lea.vmem [#allocation1], 34
    %827 = vst [vmem:[%s826] ss:$4 sm:$0xff] %v797
    %s828 = scalar_lea.vmem [#allocation1], 35
    %829 = vst [vmem:[%s828] ss:$4 sm:$0xff] %v798
    %v830 = vld.sshfl [vmem:[#allocation1] sm:$0xff pattern:$0x73625140]
    %v831 = vld.sshfl [vmem:[#allocation1 + $0x20] sm:$0xff pattern:$0x73625140]
    %v832 = vsel %vm147, %v830, 0
    %v834 = vsel %vm147, %v831, 0
    %836 = vmatpush.msra.mxu0 0.0
    %837 = vmatpush.msra.mxu0 0.0
    %838 = vmatpush.msra.mxu0 0.0
    %839 = vmatpush.msra.mxu0 0.0
    %840 = vmatpush.msra.mxu0 0.0
    %841 = vmatpush.msra.mxu0 0.0
    %842 = vmatpush.msra.mxu0 0.0
    %843 = vmatpush.msra.mxu0 0.0
    %844 = vmatpush.msra.mxu0 0.0
    %845 = vmatpush.msra.mxu0 0.0
    %846 = vmatpush.msra.mxu0 0.0
    %847 = vmatpush.msra.mxu0 0.0
    %848 = vmatpush.msra.mxu0 %v802
    %849 = vmatpush.msra.mxu0 %v801
    %850 = vmatpush.msra.mxu0 %v800
    %851 = vmatpush.msra.mxu0 %v799
    %852 = vmatmul.f32.gmra.mxu0 %v832
    %v853 = vpop.f32.mrf.mxu0
    %v854 = vadd.f32 %v805, %v853
    %855 = vmatmul.f32.gmra.mxu0 %v834
    %v856 = vpop.f32.mrf.mxu0
    %v857 = vadd.f32 %v805, %v856
    %858 = vdwg.mxu0
    %v861 = vrot.slane %v854, 2
    %v862 = vrot.slane %v854, 4
    %v863 = vrot.slane %v854, 6
    %v864 = vrot.slane %v857, 2
    %v865 = vrot.slane %v857, 4
    %v866 = vrot.slane %v857, 6
    %873 = vst [vmem:[#allocation2] sm:$0x3] %v854
    %874 = vst [vmem:[#allocation2 + $0x2] sm:$0x3] %v861
    %875 = vst [vmem:[#allocation2 + $0x4] sm:$0x3] %v862
    %876 = vst [vmem:[#allocation2 + $0x6] sm:$0x3] %v863
    %877 = vst [vmem:[#allocation2 + $0x8] sm:$0x3] %v857
    %878 = vst [vmem:[#allocation2 + $0xa] sm:$0x3] %v864
    %879 = vst [vmem:[#allocation2 + $0xc] sm:$0x3] %v865
    %880 = vst [vmem:[#allocation2 + $0xe] sm:$0x3] %v866
    %881 = vst.msk [vmem:[#allocation4] sm:$0x3] %vm137, 0.0
    %882 = vst.msk [vmem:[#allocation5] sm:$0x3] %vm137, 0.0
    %v883 = vld [vmem:[#allocation6] sm:$0xff]
    %v884 = vld [vmem:[#allocation6 + $0x8] sm:$0xff]
    %v885 = vld [vmem:[#allocation6 + $0x10] sm:$0xff]
    %v886 = vld [vmem:[#allocation6 + $0x18] sm:$0xff]
    %v887 = vld [vmem:[#allocation4] sm:$0x3]
    %v888 = vld [vmem:[#allocation5] sm:$0x3]
    %v889 = vld [vmem:[#allocation2] sm:$0x3]
    %v891 = vsel %vm147, %v887, 0
    %893 = vmatpush.msra.mxu0 0.0
    %894 = vmatpush.msra.mxu0 0.0
    %895 = vmatpush.msra.mxu0 0.0
    %896 = vmatpush.msra.mxu0 0.0
    %897 = vmatpush.msra.mxu0 0.0
    %898 = vmatpush.msra.mxu0 0.0
    %899 = vmatpush.msra.mxu0 0.0
    %900 = vmatpush.msra.mxu0 0.0
    %901 = vmatpush.msra.mxu0 0.0
    %902 = vmatpush.msra.mxu0 0.0
    %903 = vmatpush.msra.mxu0 0.0
    %904 = vmatpush.msra.mxu0 0.0
    %905 = vmatpush.msra.mxu0 %v886
    %906 = vmatpush.msra.mxu0 %v885
    %907 = vmatpush.msra.mxu0 %v884
    %908 = vmatpush.msra.mxu0 %v883
    %909 = vmatmul.f32.gmra.mxu0 %v891
    %v910 = vpop.f32.mrf.mxu0
    %v911 = vadd.f32 0.0, %v910
    %912 = vdwg.mxu0
    %v913 = vadd.f32 %v889, %v911
    %v914 = vxor.u32 %v913, 2147483648
    %v915 = vmul.f32 %v914, 1.442695
    %v916 = vpow.pop %v915
    %v917 = vadd.f32 %v916, 1.0
    %v918 = vrcp.pop %v917
    %v919 = vmul.f32 %v917, %v918
    %v920 = vsub.f32 1.0, %v919
    %v921 = vmul.f32 %v918, %v920
    %v922 = vadd.f32 %v918, %v921
    %vm923 = vweird.f32 %v917
    %vm924 = vweird.f32 %v918
    %vm925 = vmor %vm923, %vm924
    %v926 = vsel %vm925, %v918, %v922
    %v927 = vand.u32 2147483647, %v917
    %vm928 = vcmp.eq.f32.partialorder %v927, 8.507059e+37
    %v929 = vand.u32 %v917, 2147483648
    %v930 = vor.u32 1.1754944e-38, %v929
    %v931 = vsel %vm928, %v930, %v926
    %v932 = vmul.f32 1.0, %v931
    %v933 = vtanh.pop %v913
    %935 = vrot.lane.b32.xlu0 %v888, 32
    %v936 = vpop.permute.xlu0 %935
    %v938 = vmul.f32 %v932, %v936
    %940 = vrot.lane.b32.xlu0 %v933, 64
    %v941 = vpop.permute.xlu0 %940
    %v943 = vmul.f32 %v932, %v941
    %945 = vrot.lane.b32.xlu0 %v943, 32
    %v946 = vpop.permute.xlu0 %945
    %v948 = vadd.f32 %v938, %v946
    %v949 = vtanh.pop %v948
    %951 = vrot.lane.b32.xlu0 %v949, 64
    %v952 = vpop.permute.xlu0 %951
    %v954 = vmul.f32 %v932, %v952
    %956 = vrot.lane.b32.xlu0 %v948, 96
    %v957 = vpop.permute.xlu0 %956
    %959 = vst.msk [vmem:[#allocation5] sm:$0x3] %vm137, %v957
    %961 = vrot.lane.b32.xlu0 %v954, 32
    %v962 = vpop.permute.xlu0 %961
    %964 = vst.msk [vmem:[#allocation4] sm:$0x3] %vm137, %v962
    %965 = vst.msk [vmem:[#allocation3] sm:$0x3] %vm137, %v962
    %v966 = vld [vmem:[#allocation4] sm:$0x3]
    %v967 = vld [vmem:[#allocation5] sm:$0x3]
    %v968 = vld [vmem:[%s226] sm:$0x3]
    %v970 = vsel %vm147, %v966, 0
    %972 = vmatpush.msra.mxu0 0.0
    %973 = vmatpush.msra.mxu0 0.0
    %974 = vmatpush.msra.mxu0 0.0
    %975 = vmatpush.msra.mxu0 0.0
    %976 = vmatpush.msra.mxu0 0.0
    %977 = vmatpush.msra.mxu0 0.0
    %978 = vmatpush.msra.mxu0 0.0
    %979 = vmatpush.msra.mxu0 0.0
    %980 = vmatpush.msra.mxu0 0.0
    %981 = vmatpush.msra.mxu0 0.0
    %982 = vmatpush.msra.mxu0 0.0
    %983 = vmatpush.msra.mxu0 0.0
    %984 = vmatpush.msra.mxu0 %v886
    %985 = vmatpush.msra.mxu0 %v885
    %986 = vmatpush.msra.mxu0 %v884
    %987 = vmatpush.msra.mxu0 %v883
    %988 = vmatmul.f32.gmra.mxu0 %v970
    %v989 = vpop.f32.mrf.mxu0
    %v990 = vadd.f32 0.0, %v989
    %991 = vdwg.mxu0
    %v992 = vadd.f32 %v968, %v990
    %v993 = vxor.u32 %v992, 2147483648
    %v994 = vmul.f32 %v993, 1.442695
    %v995 = vpow.pop %v994
    %v996 = vadd.f32 %v995, 1.0
    %v997 = vrcp.pop %v996
    %v998 = vmul.f32 %v996, %v997
    %v999 = vsub.f32 1.0, %v998
    %v1000 = vmul.f32 %v997, %v999
    %v1001 = vadd.f32 %v997, %v1000
    %vm1002 = vweird.f32 %v996
    %vm1003 = vweird.f32 %v997
    %vm1004 = vmor %vm1002, %vm1003
    %v1005 = vsel %vm1004, %v997, %v1001
    %v1006 = vand.u32 2147483647, %v996
    %vm1007 = vcmp.eq.f32.partialorder %v1006, 8.507059e+37
    %v1008 = vand.u32 %v996, 2147483648
    %v1009 = vor.u32 1.1754944e-38, %v1008
    %v1010 = vsel %vm1007, %v1009, %v1005
    %v1011 = vmul.f32 1.0, %v1010
    %v1012 = vtanh.pop %v992
    %1014 = vrot.lane.b32.xlu0 %v967, 32
    %v1015 = vpop.permute.xlu0 %1014
    %v1017 = vmul.f32 %v1011, %v1015
    %1019 = vrot.lane.b32.xlu0 %v1012, 64
    %v1020 = vpop.permute.xlu0 %1019
    %v1022 = vmul.f32 %v1011, %v1020
    %1024 = vrot.lane.b32.xlu0 %v1022, 32
    %v1025 = vpop.permute.xlu0 %1024
    %v1027 = vadd.f32 %v1017, %v1025
    %v1028 = vtanh.pop %v1027
    %1030 = vrot.lane.b32.xlu0 %v1028, 64
    %v1031 = vpop.permute.xlu0 %1030
    %v1033 = vmul.f32 %v1011, %v1031
    %1035 = vrot.lane.b32.xlu0 %v1027, 96
    %v1036 = vpop.permute.xlu0 %1035
    %1038 = vst.msk [vmem:[#allocation5] sm:$0x3] %vm137, %v1036
    %1040 = vrot.lane.b32.xlu0 %v1033, 32
    %v1041 = vpop.permute.xlu0 %1040
    %1043 = vst.msk [vmem:[#allocation4] sm:$0x3] %vm137, %v1041
    %1044 = vst.msk [vmem:[%s303] sm:$0x3] %vm137, %v1041
    %v1045 = vld [vmem:[#allocation4] sm:$0x3]
    %v1046 = vld [vmem:[#allocation5] sm:$0x3]
    %v1047 = vld [vmem:[%s307] sm:$0x3]
    %v1049 = vsel %vm147, %v1045, 0
    %1051 = vmatpush.msra.mxu0 0.0
    %1052 = vmatpush.msra.mxu0 0.0
    %1053 = vmatpush.msra.mxu0 0.0
    %1054 = vmatpush.msra.mxu0 0.0
    %1055 = vmatpush.msra.mxu0 0.0
    %1056 = vmatpush.msra.mxu0 0.0
    %1057 = vmatpush.msra.mxu0 0.0
    %1058 = vmatpush.msra.mxu0 0.0
    %1059 = vmatpush.msra.mxu0 0.0
    %1060 = vmatpush.msra.mxu0 0.0
    %1061 = vmatpush.msra.mxu0 0.0
    %1062 = vmatpush.msra.mxu0 0.0
    %1063 = vmatpush.msra.mxu0 %v886
    %1064 = vmatpush.msra.mxu0 %v885
    %1065 = vmatpush.msra.mxu0 %v884
    %1066 = vmatpush.msra.mxu0 %v883
    %1067 = vmatmul.f32.gmra.mxu0 %v1049
    %v1068 = vpop.f32.mrf.mxu0
    %v1069 = vadd.f32 0.0, %v1068
    %1070 = vdwg.mxu0
    %v1071 = vadd.f32 %v1047, %v1069
    %v1072 = vxor.u32 %v1071, 2147483648
    %v1073 = vmul.f32 %v1072, 1.442695
    %v1074 = vpow.pop %v1073
    %v1075 = vadd.f32 %v1074, 1.0
    %v1076 = vrcp.pop %v1075
    %v1077 = vmul.f32 %v1075, %v1076
    %v1078 = vsub.f32 1.0, %v1077
    %v1079 = vmul.f32 %v1076, %v1078
    %v1080 = vadd.f32 %v1076, %v1079
    %vm1081 = vweird.f32 %v1075
    %vm1082 = vweird.f32 %v1076
    %vm1083 = vmor %vm1081, %vm1082
    %v1084 = vsel %vm1083, %v1076, %v1080
    %v1085 = vand.u32 2147483647, %v1075
    %vm1086 = vcmp.eq.f32.partialorder %v1085, 8.507059e+37
    %v1087 = vand.u32 %v1075, 2147483648
    %v1088 = vor.u32 1.1754944e-38, %v1087
    %v1089 = vsel %vm1086, %v1088, %v1084
    %v1090 = vmul.f32 1.0, %v1089
    %v1091 = vtanh.pop %v1071
    %1093 = vrot.lane.b32.xlu0 %v1046, 32
    %v1094 = vpop.permute.xlu0 %1093
    %v1096 = vmul.f32 %v1090, %v1094
    %1098 = vrot.lane.b32.xlu0 %v1091, 64
    %v1099 = vpop.permute.xlu0 %1098
    %v1101 = vmul.f32 %v1090, %v1099
    %1103 = vrot.lane.b32.xlu0 %v1101, 32
    %v1104 = vpop.permute.xlu0 %1103
    %v1106 = vadd.f32 %v1096, %v1104
    %v1107 = vtanh.pop %v1106
    %1109 = vrot.lane.b32.xlu0 %v1107, 64
    %v1110 = vpop.permute.xlu0 %1109
    %v1112 = vmul.f32 %v1090, %v1110
    %1114 = vrot.lane.b32.xlu0 %v1106, 96
    %v1115 = vpop.permute.xlu0 %1114
    %1117 = vst.msk [vmem:[#allocation5] sm:$0x3] %vm137, %v1115
    %1119 = vrot.lane.b32.xlu0 %v1112, 32
    %v1120 = vpop.permute.xlu0 %1119
    %1122 = vst.msk [vmem:[#allocation4] sm:$0x3] %vm137, %v1120
    %1123 = vst.msk [vmem:[%s384] sm:$0x3] %vm137, %v1120
    %v1124 = vld [vmem:[#allocation4] sm:$0x3]
    %v1125 = vld [vmem:[#allocation5] sm:$0x3]
    %v1126 = vld [vmem:[%s388] sm:$0x3]
    %v1128 = vsel %vm147, %v1124, 0
    %1130 = vmatpush.msra.mxu0 0.0
    %1131 = vmatpush.msra.mxu0 0.0
    %1132 = vmatpush.msra.mxu0 0.0
    %1133 = vmatpush.msra.mxu0 0.0
    %1134 = vmatpush.msra.mxu0 0.0
    %1135 = vmatpush.msra.mxu0 0.0
    %1136 = vmatpush.msra.mxu0 0.0
    %1137 = vmatpush.msra.mxu0 0.0
    %1138 = vmatpush.msra.mxu0 0.0
    %1139 = vmatpush.msra.mxu0 0.0
    %1140 = vmatpush.msra.mxu0 0.0
    %1141 = vmatpush.msra.mxu0 0.0
    %1142 = vmatpush.msra.mxu0 %v886
    %1143 = vmatpush.msra.mxu0 %v885
    %1144 = vmatpush.msra.mxu0 %v884
    %1145 = vmatpush.msra.mxu0 %v883
    %1146 = vmatmul.f32.gmra.mxu0 %v1128
    %v1147 = vpop.f32.mrf.mxu0
    %v1148 = vadd.f32 0.0, %v1147
    %1149 = vdwg.mxu0
    %v1150 = vadd.f32 %v1126, %v1148
    %v1151 = vxor.u32 %v1150, 2147483648
    %v1152 = vmul.f32 %v1151, 1.442695
    %v1153 = vpow.pop %v1152
    %v1154 = vadd.f32 %v1153, 1.0
    %v1155 = vrcp.pop %v1154
    %v1156 = vmul.f32 %v1154, %v1155
    %v1157 = vsub.f32 1.0, %v1156
    %v1158 = vmul.f32 %v1155, %v1157
    %v1159 = vadd.f32 %v1155, %v1158
    %vm1160 = vweird.f32 %v1154
    %vm1161 = vweird.f32 %v1155
    %vm1162 = vmor %vm1160, %vm1161
    %v1163 = vsel %vm1162, %v1155, %v1159
    %v1164 = vand.u32 2147483647, %v1154
    %vm1165 = vcmp.eq.f32.partialorder %v1164, 8.507059e+37
    %v1166 = vand.u32 %v1154, 2147483648
    %v1167 = vor.u32 1.1754944e-38, %v1166
    %v1168 = vsel %vm1165, %v1167, %v1163
    %v1169 = vmul.f32 1.0, %v1168
    %v1170 = vtanh.pop %v1150
    %1172 = vrot.lane.b32.xlu0 %v1125, 32
    %v1173 = vpop.permute.xlu0 %1172
    %v1175 = vmul.f32 %v1169, %v1173
    %1177 = vrot.lane.b32.xlu0 %v1170, 64
    %v1178 = vpop.permute.xlu0 %1177
    %v1180 = vmul.f32 %v1169, %v1178
    %1182 = vrot.lane.b32.xlu0 %v1180, 32
    %v1183 = vpop.permute.xlu0 %1182
    %v1185 = vadd.f32 %v1175, %v1183
    %v1186 = vtanh.pop %v1185
    %1188 = vrot.lane.b32.xlu0 %v1186, 64
    %v1189 = vpop.permute.xlu0 %1188
    %v1191 = vmul.f32 %v1169, %v1189
    %1193 = vrot.lane.b32.xlu0 %v1185, 96
    %v1194 = vpop.permute.xlu0 %1193
    %1196 = vst.msk [vmem:[#allocation5] sm:$0x3] %vm137, %v1194
    %1198 = vrot.lane.b32.xlu0 %v1191, 32
    %v1199 = vpop.permute.xlu0 %1198
    %1201 = vst.msk [vmem:[#allocation4] sm:$0x3] %vm137, %v1199
    %1202 = vst.msk [vmem:[%s465] sm:$0x3] %vm137, %v1199
    %v1203 = vld [vmem:[#allocation4] sm:$0x3]
    %v1204 = vld [vmem:[#allocation5] sm:$0x3]
    %v1205 = vld [vmem:[%s469] sm:$0x3]
    %v1207 = vsel %vm147, %v1203, 0
    %1209 = vmatpush.msra.mxu0 0.0
    %1210 = vmatpush.msra.mxu0 0.0
    %1211 = vmatpush.msra.mxu0 0.0
    %1212 = vmatpush.msra.mxu0 0.0
    %1213 = vmatpush.msra.mxu0 0.0
    %1214 = vmatpush.msra.mxu0 0.0
    %1215 = vmatpush.msra.mxu0 0.0
    %1216 = vmatpush.msra.mxu0 0.0
    %1217 = vmatpush.msra.mxu0 0.0
    %1218 = vmatpush.msra.mxu0 0.0
    %1219 = vmatpush.msra.mxu0 0.0
    %1220 = vmatpush.msra.mxu0 0.0
    %1221 = vmatpush.msra.mxu0 %v886
    %1222 = vmatpush.msra.mxu0 %v885
    %1223 = vmatpush.msra.mxu0 %v884
    %1224 = vmatpush.msra.mxu0 %v883
    %1225 = vmatmul.f32.gmra.mxu0 %v1207
    %v1226 = vpop.f32.mrf.mxu0
    %v1227 = vadd.f32 0.0, %v1226
    %1228 = vdwg.mxu0
    %v1229 = vadd.f32 %v1205, %v1227
    %v1230 = vxor.u32 %v1229, 2147483648
    %v1231 = vmul.f32 %v1230, 1.442695
    %v1232 = vpow.pop %v1231
    %v1233 = vadd.f32 %v1232, 1.0
    %v1234 = vrcp.pop %v1233
    %v1235 = vmul.f32 %v1233, %v1234
    %v1236 = vsub.f32 1.0, %v1235
    %v1237 = vmul.f32 %v1234, %v1236
    %v1238 = vadd.f32 %v1234, %v1237
    %vm1239 = vweird.f32 %v1233
    %vm1240 = vweird.f32 %v1234
    %vm1241 = vmor %vm1239, %vm1240
    %v1242 = vsel %vm1241, %v1234, %v1238
    %v1243 = vand.u32 2147483647, %v1233
    %vm1244 = vcmp.eq.f32.partialorder %v1243, 8.507059e+37
    %v1245 = vand.u32 %v1233, 2147483648
    %v1246 = vor.u32 1.1754944e-38, %v1245
    %v1247 = vsel %vm1244, %v1246, %v1242
    %v1248 = vmul.f32 1.0, %v1247
    %v1249 = vtanh.pop %v1229
    %1251 = vrot.lane.b32.xlu0 %v1204, 32
    %v1252 = vpop.permute.xlu0 %1251
    %v1254 = vmul.f32 %v1248, %v1252
    %1256 = vrot.lane.b32.xlu0 %v1249, 64
    %v1257 = vpop.permute.xlu0 %1256
    %v1259 = vmul.f32 %v1248, %v1257
    %1261 = vrot.lane.b32.xlu0 %v1259, 32
    %v1262 = vpop.permute.xlu0 %1261
    %v1264 = vadd.f32 %v1254, %v1262
    %v1265 = vtanh.pop %v1264
    %1267 = vrot.lane.b32.xlu0 %v1265, 64
    %v1268 = vpop.permute.xlu0 %1267
    %v1270 = vmul.f32 %v1248, %v1268
    %1272 = vrot.lane.b32.xlu0 %v1264, 96
    %v1273 = vpop.permute.xlu0 %1272
    %1275 = vst.msk [vmem:[#allocation5] sm:$0x3] %vm137, %v1273
    %1277 = vrot.lane.b32.xlu0 %v1270, 32
    %v1278 = vpop.permute.xlu0 %1277
    %1280 = vst.msk [vmem:[#allocation4] sm:$0x3] %vm137, %v1278
    %1281 = vst.msk [vmem:[%s546] sm:$0x3] %vm137, %v1278
    %v1282 = vld [vmem:[#allocation4] sm:$0x3]
    %v1283 = vld [vmem:[#allocation5] sm:$0x3]
    %v1284 = vld [vmem:[%s550] sm:$0x3]
    %v1286 = vsel %vm147, %v1282, 0
    %1288 = vmatpush.msra.mxu0 0.0
    %1289 = vmatpush.msra.mxu0 0.0
    %1290 = vmatpush.msra.mxu0 0.0
    %1291 = vmatpush.msra.mxu0 0.0
    %1292 = vmatpush.msra.mxu0 0.0
    %1293 = vmatpush.msra.mxu0 0.0
    %1294 = vmatpush.msra.mxu0 0.0
    %1295 = vmatpush.msra.mxu0 0.0
    %1296 = vmatpush.msra.mxu0 0.0
    %1297 = vmatpush.msra.mxu0 0.0
    %1298 = vmatpush.msra.mxu0 0.0
    %1299 = vmatpush.msra.mxu0 0.0
    %1300 = vmatpush.msra.mxu0 %v886
    %1301 = vmatpush.msra.mxu0 %v885
    %1302 = vmatpush.msra.mxu0 %v884
    %1303 = vmatpush.msra.mxu0 %v883
    %1304 = vmatmul.f32.gmra.mxu0 %v1286
    %v1305 = vpop.f32.mrf.mxu0
    %v1306 = vadd.f32 0.0, %v1305
    %1307 = vdwg.mxu0
    %v1308 = vadd.f32 %v1284, %v1306
    %v1309 = vxor.u32 %v1308, 2147483648
    %v1310 = vmul.f32 %v1309, 1.442695
    %v1311 = vpow.pop %v1310
    %v1312 = vadd.f32 %v1311, 1.0
    %v1313 = vrcp.pop %v1312
    %v1314 = vmul.f32 %v1312, %v1313
    %v1315 = vsub.f32 1.0, %v1314
    %v1316 = vmul.f32 %v1313, %v1315
    %v1317 = vadd.f32 %v1313, %v1316
    %vm1318 = vweird.f32 %v1312
    %vm1319 = vweird.f32 %v1313
    %vm1320 = vmor %vm1318, %vm1319
    %v1321 = vsel %vm1320, %v1313, %v1317
    %v1322 = vand.u32 2147483647, %v1312
    %vm1323 = vcmp.eq.f32.partialorder %v1322, 8.507059e+37
    %v1324 = vand.u32 %v1312, 2147483648
    %v1325 = vor.u32 1.1754944e-38, %v1324
    %v1326 = vsel %vm1323, %v1325, %v1321
    %v1327 = vmul.f32 1.0, %v1326
    %v1328 = vtanh.pop %v1308
    %1330 = vrot.lane.b32.xlu0 %v1283, 32
    %v1331 = vpop.permute.xlu0 %1330
    %v1333 = vmul.f32 %v1327, %v1331
    %1335 = vrot.lane.b32.xlu0 %v1328, 64
    %v1336 = vpop.permute.xlu0 %1335
    %v1338 = vmul.f32 %v1327, %v1336
    %1340 = vrot.lane.b32.xlu0 %v1338, 32
    %v1341 = vpop.permute.xlu0 %1340
    %v1343 = vadd.f32 %v1333, %v1341
    %v1344 = vtanh.pop %v1343
    %1346 = vrot.lane.b32.xlu0 %v1344, 64
    %v1347 = vpop.permute.xlu0 %1346
    %v1349 = vmul.f32 %v1327, %v1347
    %1351 = vrot.lane.b32.xlu0 %v1343, 96
    %v1352 = vpop.permute.xlu0 %1351
    %1354 = vst.msk [vmem:[#allocation5] sm:$0x3] %vm137, %v1352
    %1356 = vrot.lane.b32.xlu0 %v1349, 32
    %v1357 = vpop.permute.xlu0 %1356
    %1359 = vst.msk [vmem:[#allocation4] sm:$0x3] %vm137, %v1357
    %1360 = vst.msk [vmem:[%s627] sm:$0x3] %vm137, %v1357
    %v1361 = vld [vmem:[#allocation4] sm:$0x3]
    %v1362 = vld [vmem:[#allocation5] sm:$0x3]
    %v1363 = vld [vmem:[%s631] sm:$0x3]
    %v1365 = vsel %vm147, %v1361, 0
    %1367 = vmatpush.msra.mxu0 0.0
    %1368 = vmatpush.msra.mxu0 0.0
    %1369 = vmatpush.msra.mxu0 0.0
    %1370 = vmatpush.msra.mxu0 0.0
    %1371 = vmatpush.msra.mxu0 0.0
    %1372 = vmatpush.msra.mxu0 0.0
    %1373 = vmatpush.msra.mxu0 0.0
    %1374 = vmatpush.msra.mxu0 0.0
    %1375 = vmatpush.msra.mxu0 0.0
    %1376 = vmatpush.msra.mxu0 0.0
    %1377 = vmatpush.msra.mxu0 0.0
    %1378 = vmatpush.msra.mxu0 0.0
    %1379 = vmatpush.msra.mxu0 %v886
    %1380 = vmatpush.msra.mxu0 %v885
    %1381 = vmatpush.msra.mxu0 %v884
    %1382 = vmatpush.msra.mxu0 %v883
    %1383 = vmatmul.f32.gmra.mxu0 %v1365
    %v1384 = vpop.f32.mrf.mxu0
    %v1385 = vadd.f32 0.0, %v1384
    %1386 = vdwg.mxu0
    %v1387 = vadd.f32 %v1363, %v1385
    %v1388 = vxor.u32 %v1387, 2147483648
    %v1389 = vmul.f32 %v1388, 1.442695
    %v1390 = vpow.pop %v1389
    %v1391 = vadd.f32 %v1390, 1.0
    %v1392 = vrcp.pop %v1391
    %v1393 = vmul.f32 %v1391, %v1392
    %v1394 = vsub.f32 1.0, %v1393
    %v1395 = vmul.f32 %v1392, %v1394
    %v1396 = vadd.f32 %v1392, %v1395
    %vm1397 = vweird.f32 %v1391
    %vm1398 = vweird.f32 %v1392
    %vm1399 = vmor %vm1397, %vm1398
    %v1400 = vsel %vm1399, %v1392, %v1396
    %v1401 = vand.u32 2147483647, %v1391
    %vm1402 = vcmp.eq.f32.partialorder %v1401, 8.507059e+37
    %v1403 = vand.u32 %v1391, 2147483648
    %v1404 = vor.u32 1.1754944e-38, %v1403
    %v1405 = vsel %vm1402, %v1404, %v1400
    %v1406 = vmul.f32 1.0, %v1405
    %v1407 = vtanh.pop %v1387
    %1409 = vrot.lane.b32.xlu0 %v1362, 32
    %v1410 = vpop.permute.xlu0 %1409
    %v1412 = vmul.f32 %v1406, %v1410
    %1414 = vrot.lane.b32.xlu0 %v1407, 64
    %v1415 = vpop.permute.xlu0 %1414
    %v1417 = vmul.f32 %v1406, %v1415
    %1419 = vrot.lane.b32.xlu0 %v1417, 32
    %v1420 = vpop.permute.xlu0 %1419
    %v1422 = vadd.f32 %v1412, %v1420
    %v1423 = vtanh.pop %v1422
    %1425 = vrot.lane.b32.xlu0 %v1423, 64
    %v1426 = vpop.permute.xlu0 %1425
    %v1428 = vmul.f32 %v1406, %v1426
    %1430 = vrot.lane.b32.xlu0 %v1422, 96
    %v1431 = vpop.permute.xlu0 %1430
    %1433 = vst.msk [vmem:[#allocation5] sm:$0x3] %vm137, %v1431
    %1435 = vrot.lane.b32.xlu0 %v1428, 32
    %v1436 = vpop.permute.xlu0 %1435
    %1438 = vst.msk [vmem:[#allocation4] sm:$0x3] %vm137, %v1436
    %1439 = vst.msk [vmem:[%s708] sm:$0x3] %vm137, %v1436
    %v1440 = vld [vmem:[#allocation4] sm:$0x3]
    %v1441 = vld [vmem:[#allocation5] sm:$0x3]
    %v1442 = vld [vmem:[%s712] sm:$0x3]
    %v1444 = vsel %vm147, %v1440, 0
    %1446 = vmatpush.msra.mxu0 0.0
    %1447 = vmatpush.msra.mxu0 0.0
    %1448 = vmatpush.msra.mxu0 0.0
    %1449 = vmatpush.msra.mxu0 0.0
    %1450 = vmatpush.msra.mxu0 0.0
    %1451 = vmatpush.msra.mxu0 0.0
    %1452 = vmatpush.msra.mxu0 0.0
    %1453 = vmatpush.msra.mxu0 0.0
    %1454 = vmatpush.msra.mxu0 0.0
    %1455 = vmatpush.msra.mxu0 0.0
    %1456 = vmatpush.msra.mxu0 0.0
    %1457 = vmatpush.msra.mxu0 0.0
    %1458 = vmatpush.msra.mxu0 %v886
    %1459 = vmatpush.msra.mxu0 %v885
    %1460 = vmatpush.msra.mxu0 %v884
    %1461 = vmatpush.msra.mxu0 %v883
    %1462 = vmatmul.f32.gmra.mxu0 %v1444
    %v1463 = vpop.f32.mrf.mxu0
    %v1464 = vadd.f32 0.0, %v1463
    %1465 = vdwg.mxu0
    %v1466 = vadd.f32 %v1442, %v1464
    %v1467 = vxor.u32 %v1466, 2147483648
    %v1468 = vmul.f32 %v1467, 1.442695
    %v1469 = vpow.pop %v1468
    %v1470 = vadd.f32 %v1469, 1.0
    %v1471 = vrcp.pop %v1470
    %v1472 = vmul.f32 %v1470, %v1471
    %v1473 = vsub.f32 1.0, %v1472
    %v1474 = vmul.f32 %v1471, %v1473
    %v1475 = vadd.f32 %v1471, %v1474
    %vm1476 = vweird.f32 %v1470
    %vm1477 = vweird.f32 %v1471
    %vm1478 = vmor %vm1476, %vm1477
    %v1479 = vsel %vm1478, %v1471, %v1475
    %v1480 = vand.u32 2147483647, %v1470
    %vm1481 = vcmp.eq.f32.partialorder %v1480, 8.507059e+37
    %v1482 = vand.u32 %v1470, 2147483648
    %v1483 = vor.u32 1.1754944e-38, %v1482
    %v1484 = vsel %vm1481, %v1483, %v1479
    %v1485 = vmul.f32 1.0, %v1484
    %v1486 = vtanh.pop %v1466
    %1488 = vrot.lane.b32.xlu0 %v1441, 32
    %v1489 = vpop.permute.xlu0 %1488
    %v1491 = vmul.f32 %v1485, %v1489
    %1493 = vrot.lane.b32.xlu0 %v1486, 64
    %v1494 = vpop.permute.xlu0 %1493
    %v1496 = vmul.f32 %v1485, %v1494
    %1498 = vrot.lane.b32.xlu0 %v1496, 32
    %v1499 = vpop.permute.xlu0 %1498
    %v1501 = vadd.f32 %v1491, %v1499
    %v1502 = vtanh.pop %v1501
    %1504 = vrot.lane.b32.xlu0 %v1502, 64
    %v1505 = vpop.permute.xlu0 %1504
    %v1507 = vmul.f32 %v1485, %v1505
    %1509 = vrot.lane.b32.xlu0 %v1501, 96
    %v1510 = vpop.permute.xlu0 %1509
    %1512 = vst.msk [vmem:[#allocation5] sm:$0x3] %vm137, %v1510
    %1514 = vrot.lane.b32.xlu0 %v1507, 32
    %v1515 = vpop.permute.xlu0 %1514
    %1517 = vst.msk [vmem:[#allocation4] sm:$0x3] %vm137, %v1515
    %1518 = vst.msk [vmem:[%s789] sm:$0x3] %vm137, %v1515
    %v1519 = vld [vmem:[#allocation3] sm:$0x3]
    %v1520 = vld [vmem:[#allocation3 + $0x2] sm:$0x3]
    %v1521 = vld [vmem:[#allocation3 + $0x4] sm:$0x3]
    %v1522 = vld [vmem:[#allocation3 + $0x6] sm:$0x3]
    %v1523 = vld [vmem:[#allocation3 + $0x8] sm:$0x3]
    %v1524 = vld [vmem:[#allocation3 + $0xa] sm:$0x3]
    %v1525 = vld [vmem:[#allocation3 + $0xc] sm:$0x3]
    %v1526 = vld [vmem:[#allocation3 + $0xe] sm:$0x3]
    %v1527 = vld [vmem:[%s7] sm:$0xff]
    %v1528 = vld [vmem:[%s7 + $0x8] sm:$0xff]
    %v1529 = vld [vmem:[%s7 + $0x10] sm:$0xff]
    %v1530 = vld [vmem:[%s7 + $0x18] sm:$0xff]
    %v1531 = vld [vmem:[%s8] sm:$0x1]
    %v1533 = vperm.slane %v1531, 0
    %1543 = vst [vmem:[#allocation1] ss:$4 sm:$0xff] %v1519
    %s1544 = scalar_lea.vmem [#allocation1], 1
    %1545 = vst [vmem:[%s1544] ss:$4 sm:$0xff] %v1520
    %s1546 = scalar_lea.vmem [#allocation1], 2
    %1547 = vst [vmem:[%s1546] ss:$4 sm:$0xff] %v1521
    %s1548 = scalar_lea.vmem [#allocation1], 3
    %1549 = vst [vmem:[%s1548] ss:$4 sm:$0xff] %v1522
    %s1550 = scalar_lea.vmem [#allocation1], 32
    %1551 = vst [vmem:[%s1550] ss:$4 sm:$0xff] %v1523
    %s1552 = scalar_lea.vmem [#allocation1], 33
    %1553 = vst [vmem:[%s1552] ss:$4 sm:$0xff] %v1524
    %s1554 = scalar_lea.vmem [#allocation1], 34
    %1555 = vst [vmem:[%s1554] ss:$4 sm:$0xff] %v1525
    %s1556 = scalar_lea.vmem [#allocation1], 35
    %1557 = vst [vmem:[%s1556] ss:$4 sm:$0xff] %v1526
    %v1558 = vld.sshfl [vmem:[#allocation1] sm:$0xff pattern:$0x73625140]
    %v1559 = vld.sshfl [vmem:[#allocation1 + $0x20] sm:$0xff pattern:$0x73625140]
    %v1560 = vsel %vm147, %v1558, 0
    %v1562 = vsel %vm147, %v1559, 0
    %1564 = vmatpush.msra.mxu0 0.0
    %1565 = vmatpush.msra.mxu0 0.0
    %1566 = vmatpush.msra.mxu0 0.0
    %1567 = vmatpush.msra.mxu0 0.0
    %1568 = vmatpush.msra.mxu0 0.0
    %1569 = vmatpush.msra.mxu0 0.0
    %1570 = vmatpush.msra.mxu0 0.0
    %1571 = vmatpush.msra.mxu0 0.0
    %1572 = vmatpush.msra.mxu0 0.0
    %1573 = vmatpush.msra.mxu0 0.0
    %1574 = vmatpush.msra.mxu0 0.0
    %1575 = vmatpush.msra.mxu0 0.0
    %1576 = vmatpush.msra.mxu0 %v1530
    %1577 = vmatpush.msra.mxu0 %v1529
    %1578 = vmatpush.msra.mxu0 %v1528
    %1579 = vmatpush.msra.mxu0 %v1527
    %1580 = vmatmul.f32.gmra.mxu0 %v1560
    %v1581 = vpop.f32.mrf.mxu0
    %v1582 = vadd.f32 %v1533, %v1581
    %1583 = vmatmul.f32.gmra.mxu0 %v1562
    %v1584 = vpop.f32.mrf.mxu0
    %v1585 = vadd.f32 %v1533, %v1584
    %1586 = vdwg.mxu0
    %v1589 = vrot.slane %v1582, 2
    %v1590 = vrot.slane %v1582, 4
    %v1591 = vrot.slane %v1582, 6
    %v1592 = vrot.slane %v1585, 2
    %v1593 = vrot.slane %v1585, 4
    %v1594 = vrot.slane %v1585, 6
    %vm1601 = vcmask 189440
    %1602 = vst.msk [vmem:[%s9] sm:$0x3] %vm1601, %v1582
    %1603 = vst.msk [vmem:[%s9 + $0x2] sm:$0x3] %vm1601, %v1589
    %1604 = vst.msk [vmem:[%s9 + $0x4] sm:$0x3] %vm1601, %v1590
    %1605 = vst.msk [vmem:[%s9 + $0x6] sm:$0x3] %vm1601, %v1591
    %1606 = vst.msk [vmem:[%s9 + $0x8] sm:$0x3] %vm1601, %v1585
    %1607 = vst.msk [vmem:[%s9 + $0xa] sm:$0x3] %vm1601, %v1592
    %1608 = vst.msk [vmem:[%s9 + $0xc] sm:$0x3] %vm1601, %v1593
    %1609 = vst.msk [vmem:[%s9 + $0xe] sm:$0x3] %vm1601, %v1594
    // Predicated region
    $region42: #{lstm_am_forward.1} parent=1 // pred_check
      _
    $region43: #{lstm_am_forward.1} parent=1 // pred_check_branch
      %1611 = sbr.rel (0) target = $region45
    $region44: #{lstm_am_forward.1} parent=1 // pred_region
      _
    $region45: #{lstm_am_forward.1} parent=1 // pred_fallthru
      _
    // Predicated region
    $region46: #{lstm_am_forward.1} parent=1 // pred_check
      _
    $region47: #{lstm_am_forward.1} parent=1 // pred_check_branch
      %1613 = sbr.rel (0) target = $region49
    $region48: #{lstm_am_forward.1} parent=1 // pred_region
      _
    $region49: #{lstm_am_forward.1} parent=1 // pred_fallthru
      _
    %1614 = vsyncpa [#allocation7], 1

</llo_original>
